<compile_context>
chip_gen: v6e
topology: v6e:2x2x1
jax: 0.10.0
libtpu: 0.0.40
codegen_flags: <defaults>
</compile_context>

<pallas_src>
import functools

import jax
import jax.numpy as jnp
from jax.experimental import pallas as pl
from jax.experimental.pallas import tpu as pltpu


# ----------------------------------------------------------------------------
# Fused kernel: both GCN streams (selected via grid axis 0) + node-level mlp1.
# ----------------------------------------------------------------------------
def _prelu(z, a):
    return jnp.where(z > 0.0, z, a * z)


def _fused_gcn_mlp1_kernel(num_layers, gb, *refs):
    """One grid step = (stream, block of Gb graphs).

    Ref order (set by the wrapper):
      feat (1,Gb,N,Fin), adj (1,Gb,N,N),
      w0 (1,Fin,H), [wrest (1,L-1,H,H) if L>1], b (1,L,H),
      mlp1_w (4,H,H), mlp1_b (4,H), slopes (SMEM, (2L+3,)),
      outputs: lv (1,Gb,N,H), gs (1,Gb,L,H)
    """
    idx = 0
    feat_ref = refs[idx]; idx += 1
    adj_ref = refs[idx]; idx += 1
    w0_ref = refs[idx]; idx += 1
    wrest_ref = None
    if num_layers > 1:
        wrest_ref = refs[idx]; idx += 1
    b_ref = refs[idx]; idx += 1
    mlp1_w_ref = refs[idx]; idx += 1
    mlp1_b_ref = refs[idx]; idx += 1
    slope_ref = refs[idx]; idx += 1
    lv_ref = refs[idx]; idx += 1
    gs_ref = refs[idx]; idx += 1

    stream = pl.program_id(0)
    adj = adj_ref[0]                          # (Gb, N, N)
    feat = feat_ref[0]                        # (Gb, N, Fin)
    n = adj.shape[-1]
    n_h = w0_ref.shape[-1]

    def gcn_layer(h_flat, w, bias, slope):
        cin = h_flat.shape[-1]
        cout = w.shape[-1]
        if cin < cout:
            # (adj @ h) @ w : the N^2 contraction uses the narrower width.
            m = jnp.einsum("gij,gjf->gif", adj, h_flat.reshape(gb, n, cin),
                           preferred_element_type=jnp.float32)
            z = jnp.dot(m.reshape(gb * n, cin), w,
                        preferred_element_type=jnp.float32)
        else:
            t = jnp.dot(h_flat, w, preferred_element_type=jnp.float32)
            z = jnp.einsum("gij,gjf->gif", adj, t.reshape(gb, n, cout),
                           preferred_element_type=jnp.float32)
            z = z.reshape(gb * n, cout)
        return _prelu(z + bias, slope)

    # ---- GCN stack (weights already stream-selected by the index_map) ------
    h = feat.reshape(gb * n, feat.shape[-1])
    for l in range(num_layers):
        w = w0_ref[0] if l == 0 else wrest_ref[0, l - 1]
        bias = b_ref[0, l:l + 1, :]                              # (1, H)
        slope = slope_ref[stream * num_layers + l]               # SMEM scalar
        h = gcn_layer(h, w, bias, slope)
        gsum = jnp.sum(h.reshape(gb, n, n_h), axis=1)            # (Gb, H)
        gs_ref[0, :, l:l + 1, :] = gsum.reshape(gb, 1, n_h).astype(gs_ref.dtype)

    # ---- node-level MLP (mlp1), batched over all Gb*N rows ------------------
    a1 = slope_ref[2 * num_layers + 0]
    a2 = slope_ref[2 * num_layers + 1]
    a3 = slope_ref[2 * num_layers + 2]
    w1 = mlp1_w_ref[0]
    w2 = mlp1_w_ref[1]
    w3 = mlp1_w_ref[2]
    ws = mlp1_w_ref[3]
    b1 = mlp1_b_ref[0:1, :]
    b2 = mlp1_b_ref[1:2, :]
    b3 = mlp1_b_ref[2:3, :]
    bs = mlp1_b_ref[3:4, :]

    t = _prelu(jnp.dot(h, w1, preferred_element_type=jnp.float32) + b1, a1)
    t = _prelu(jnp.dot(t, w2, preferred_element_type=jnp.float32) + b2, a2)
    t = _prelu(jnp.dot(t, w3, preferred_element_type=jnp.float32) + b3, a3)
    out = t + jnp.dot(h, ws, preferred_element_type=jnp.float32) + bs
    lv_ref[0] = out.reshape(gb, n, n_h).astype(lv_ref.dtype)


# ----------------------------------------------------------------------------
# Packing helpers (done once, outside the jit'd hot path)
# ----------------------------------------------------------------------------
def stack_inputs(adj, diff, feat, feat_diff):
    """One-time packing into the (stream, batch, ...) layout used by the kernel."""
    feat_all = jnp.stack([feat, feat_diff], axis=0)    # (2, B, N, Fin)
    adj_all = jnp.stack([adj, diff], axis=0)           # (2, B, N, N)
    return feat_all, adj_all


def pack_params(params):
    """One-time conversion of torch-convention params into the kernel layout."""
    gnn1, gnn2 = params["gnn1"], params["gnn2"]
    L = len(gnn1)

    # layer-0 weight per stream: (2, Fin, H)
    w0 = jnp.stack([gnn1[0][0].T, gnn2[0][0].T], axis=0)
    # layers 1..L-1 per stream: (2, L-1, H, H)
    wrest = None
    if L > 1:
        wrest = jnp.stack([
            jnp.stack([gnn1[l][0].T for l in range(1, L)], axis=0),
            jnp.stack([gnn2[l][0].T for l in range(1, L)], axis=0)], axis=0)
    # all GCN biases: (2, L, H)
    b = jnp.stack([
        jnp.stack([gnn1[l][1] for l in range(L)], axis=0),
        jnp.stack([gnn2[l][1] for l in range(L)], axis=0)], axis=0)
    # all GCN PReLU slopes: (2, L)
    gcn_slopes = jnp.stack([
        jnp.stack([gnn1[l][2] for l in range(L)]),
        jnp.stack([gnn2[l][2] for l in range(L)])], axis=0)

    (m1w1, m1b1, m1a1), (m1w2, m1b2, m1a2), (m1w3, m1b3, m1a3), (m1ws, m1bs) = params["mlp1"]
    mlp1_w = jnp.stack([m1w1.T, m1w2.T, m1w3.T, m1ws.T], axis=0)   # (4, H, H)
    mlp1_b = jnp.stack([m1b1, m1b2, m1b3, m1bs], axis=0)           # (4, H)

    # single SMEM vector of PReLU slopes: [gcn(stream0 L), gcn(stream1 L), mlp1 x3]
    slopes = jnp.concatenate(
        [gcn_slopes.reshape(-1), jnp.stack([m1a1, m1a2, m1a3])], axis=0
    ).astype(jnp.float32)

    (w1, b1, a1), (w2, b2, a2), (w3, b3, a3), (ws, bs) = params["mlp2"]
    mlp2 = [w1.T, w2.T, w3.T, ws.T, b1, b2, b3, bs, a1, a2, a3]

    return {"w0": w0, "wrest": wrest, "b": b,
            "mlp1_w": mlp1_w, "mlp1_b": mlp1_b, "slopes": slopes, "mlp2": mlp2}


# ----------------------------------------------------------------------------
# Wrapper
# ----------------------------------------------------------------------------
def _pick_graphs_per_step(batch, n):
    # keep the adj block <= ~4 MiB (x2 for double buffering) so it stays
    # comfortably inside v7x's 64 MiB VMEM with headroom; divisor of batch.
    budget = 4 * 2 ** 20
    per_graph = max(4 * n * n, 1)
    cap = max(1, budget // per_graph)
    gb = 1
    for cand in range(1, batch + 1):
        if batch % cand == 0 and cand <= cap:
            gb = cand
    return gb


def _vmem_limit_bytes(gb, n, fin, n_h, num_layers):
    f = 4
    per_step = (
        gb * n * n * f                       # adj block
        + gb * n * fin * f                   # feat block
        + gb * n * n_h * f                   # lv output block
        + gb * num_layers * n_h * f          # gs output block
        + fin * n_h * f                      # w0
        + max(num_layers - 1, 0) * n_h * n_h * f
        + num_layers * n_h * f               # biases
        + 4 * n_h * n_h * f + 4 * n_h * f    # mlp1
    )
    est = 6 * per_step                       # double buffering + intermediates
    return int(min(96 * 2 ** 20, max(32 * 2 ** 20, est)))


def _mlp_dense(x, p):
    """Graph-level MLP (mlp2) as a plain batched XLA matmul (hoisted from kernel)."""
    w1, w2, w3, ws, b1, b2, b3, bs, a1, a2, a3 = p
    h = _prelu(x @ w1 + b1, a1)
    h = _prelu(h @ w2 + b2, a2)
    h = _prelu(h @ w3 + b3, a3)
    return h + x @ ws + bs


@jax.jit
def model_forward(packed, feat_all, adj_all):
    S, B, N, Fin = feat_all.shape
    assert S == 2
    n_h = packed["w0"].shape[-1]
    L = packed["b"].shape[1]
    Gb = _pick_graphs_per_step(B, N)
    grid = (2, B // Gb)

    inputs = [feat_all, adj_all, packed["w0"]]
    in_specs = [
        pl.BlockSpec((1, Gb, N, Fin), lambda s, g: (s, g, 0, 0)),
        pl.BlockSpec((1, Gb, N, N), lambda s, g: (s, g, 0, 0)),
        pl.BlockSpec((1, Fin, n_h), lambda s, g: (s, 0, 0)),
    ]
    if L > 1:
        inputs.append(packed["wrest"])
        in_specs.append(pl.BlockSpec((1, L - 1, n_h, n_h),
                                     lambda s, g: (s, 0, 0, 0)))
    inputs += [packed["b"], packed["mlp1_w"], packed["mlp1_b"], packed["slopes"]]
    in_specs += [
        pl.BlockSpec((1, L, n_h), lambda s, g: (s, 0, 0)),
        pl.BlockSpec((4, n_h, n_h), lambda s, g: (0, 0, 0)),
        pl.BlockSpec((4, n_h), lambda s, g: (0, 0)),
        pl.BlockSpec(memory_space=pltpu.MemorySpace.SMEM),   # PReLU slopes
    ]

    lv_all, gs_all = pl.pallas_call(
        functools.partial(_fused_gcn_mlp1_kernel, L, Gb),
        out_shape=(
            jax.ShapeDtypeStruct((2, B, N, n_h), jnp.float32),
            jax.ShapeDtypeStruct((2, B, L, n_h), jnp.float32),
        ),
        grid_spec=pltpu.PrefetchScalarGridSpec(
            num_scalar_prefetch=0,
            grid=grid,
            in_specs=in_specs,
            out_specs=[
                pl.BlockSpec((1, Gb, N, n_h), lambda s, g: (s, g, 0, 0)),
                pl.BlockSpec((1, Gb, L, n_h), lambda s, g: (s, g, 0, 0)),
            ],
        ),
        compiler_params=pltpu.CompilerParams(
            dimension_semantics=("parallel", "parallel"),
            vmem_limit_bytes=_vmem_limit_bytes(Gb, N, Fin, n_h, L)),
    )(*inputs)

    # mlp2 over all 2B graphs in one batched matmul (per review: M=1 matmuls
    # inside the kernel were pure pipeline-fill latency).
    gs_flat = gs_all.reshape(2 * B, L * n_h)        # layer-major == torch.cat
    gv_all = _mlp_dense(gs_flat, packed["mlp2"])

    lv1, lv2 = lv_all[0], lv_all[1]
    gv1, gv2 = gv_all[:B], gv_all[B:]
    return lv1, gv1, lv2, gv2


# ----------------------------------------------------------------------------
# Deterministic parameter construction (torch conventions, for the reference)
# ----------------------------------------------------------------------------
def _xavier(key, shape):
    fan_out, fan_in = shape
    lim = (6.0 / (fan_in + fan_out)) ** 0.5
    return jax.random.uniform(key, shape, jnp.float32, -lim, lim)


def init_params(key, n_in, n_h, num_layers):
    keys = iter(jax.random.split(key, 64))

    def gcn_layer_params(in_ft, out_ft):
        w = _xavier(next(keys), (out_ft, in_ft))
        b = jnp.zeros((out_ft,), jnp.float32)            # GCNLayer.bias filled 0
        a = jnp.array(0.25, jnp.float32)                 # nn.PReLU default
        return (w, b, a)

    def gcn_params():
        layers = [gcn_layer_params(n_in, n_h)]
        for _ in range(num_layers - 1):
            layers.append(gcn_layer_params(n_h, n_h))
        return layers

    def mlp_params(in_ft, out_ft):
        def lin(i, o):
            return (_xavier(next(keys), (o, i)),
                    0.01 * jax.random.normal(next(keys), (o,), jnp.float32))
        w1, b1 = lin(in_ft, out_ft)
        w2, b2 = lin(out_ft, out_ft)
        w3, b3 = lin(out_ft, out_ft)
        ws, bs = lin(in_ft, out_ft)
        a = jnp.array(0.25, jnp.float32)
        return ((w1, b1, a), (w2, b2, a), (w3, b3, a), (ws, bs))

    return {
        "gnn1": gcn_params(),
        "gnn2": gcn_params(),
        "mlp1": mlp_params(1 * n_h, n_h),
        "mlp2": mlp_params(num_layers * n_h, n_h),
    }


# ----------------------------------------------------------------------------
# Pure-JAX reference for verification
# ----------------------------------------------------------------------------
def _ref_prelu(x, a):
    return jnp.where(x > 0, x, a * x)


def _ref_gcn_layer(feat, adj, w, b, a):
    h = feat @ w.T
    out = jnp.einsum("bij,bjf->bif", adj, h) + b
    out = _ref_prelu(out, a)
    return out, jnp.sum(out, axis=1)


def _ref_gcn(feat, adj, layers):
    h, g = _ref_gcn_layer(feat, adj, *layers[0])
    gs = [g]
    for p in layers[1:]:
        h, g = _ref_gcn_layer(h, adj, *p)
        gs.append(g)
    return h, jnp.concatenate(gs, axis=-1)


def _ref_mlp(x, params):
    (w1, b1, a1), (w2, b2, a2), (w3, b3, a3), (ws, bs) = params
    h = _ref_prelu(x @ w1.T + b1, a1)
    h = _ref_prelu(h @ w2.T + b2, a2)
    h = _ref_prelu(h @ w3.T + b3, a3)
    return h + (x @ ws.T + bs)


def _ref_model(params, adj, diff, feat, feat_diff, mask):
    del mask
    lv1, gv1 = _ref_gcn(feat, adj, params["gnn1"])
    lv2, gv2 = _ref_gcn(feat_diff, diff, params["gnn2"])
    lv1 = _ref_mlp(lv1, params["mlp1"])
    lv2 = _ref_mlp(lv2, params["mlp1"])
    gv1 = _ref_mlp(gv1, params["mlp2"])
    gv2 = _ref_mlp(gv2, params["mlp2"])
    return lv1, gv1, lv2, gv2


# ----------------------------------------------------------------------------
if __name__ == "__main__":
    B, N, n_in, n_h, num_layers = 2, 16, 8, 32, 2

    key = jax.random.PRNGKey(0)
    k_adj, k_diff, k_feat, k_fd, k_params = jax.random.split(key, 5)

    adj = jax.random.uniform(k_adj, (B, N, N), jnp.float32)
    diff = jax.random.uniform(k_diff, (B, N, N), jnp.float32)
    feat = jax.random.normal(k_feat, (B, N, n_in), jnp.float32)
    feat_diff = jax.random.normal(k_fd, (B, N, n_in), jnp.float32)
    mask = jnp.ones((B, N), jnp.float32)   # unused by the forward, as in PyTorch

    params = init_params(k_params, n_in, n_h, num_layers)
    packed = pack_params(params)                                  # one-time weight packing
    feat_all, adj_all = stack_inputs(adj, diff, feat, feat_diff)  # one-time input packing

    outs = model_forward(packed, feat_all, adj_all)
    outs = jax.block_until_ready(outs)
    lv1, gv1, lv2, gv2 = outs

    assert lv1.shape == (B, N, n_h) and lv2.shape == (B, N, n_h)
    assert gv1.shape == (B, n_h) and gv2.shape == (B, n_h)

    # correctness vs. pure-JAX reference
    refs = _ref_model(params, adj, diff, feat, feat_diff, mask)
    for got, want in zip(outs, refs):
        assert jnp.allclose(got, want, rtol=1e-4, atol=1e-4), "mismatch vs reference"

    print("KERNEL_OK")
</pallas_src>

<mosaic_0001>
module attributes {stable_mosaic.version = 11 : i64} {
  func.func @_fused_gcn_mlp1_kernel(%arg0: i32, %arg1: i32, %arg2: memref<1x2x16x8xf32, #tpu.memory_space<vmem>>, %arg3: memref<1x2x16x16xf32, #tpu.memory_space<vmem>>, %arg4: memref<1x8x32xf32, #tpu.memory_space<vmem>>, %arg5: memref<1x1x32x32xf32, #tpu.memory_space<vmem>>, %arg6: memref<1x2x32xf32, #tpu.memory_space<vmem>>, %arg7: memref<4x32x32xf32, #tpu.memory_space<vmem>>, %arg8: memref<4x32xf32, #tpu.memory_space<vmem>>, %arg9: memref<7xf32, #tpu.memory_space<smem>>, %arg10: memref<1x2x16x32xf32, #tpu.memory_space<vmem>>, %arg11: memref<1x2x2x32xf32, #tpu.memory_space<vmem>>) attributes {dimension_semantics = [#tpu.dimension_semantics<parallel>, #tpu.dimension_semantics<parallel>], iteration_bounds = array<i64: 2, 1>, scalar_prefetch = 0 : i64, scratch_operands = 0 : i64, tpu.core_type = #tpu.core_type<tc>, window_params = [{transform_indices = @transform_0, window_bounds = array<i64: 1, 2, 16, 8>}, {transform_indices = @transform_1, window_bounds = array<i64: 1, 2, 16, 16>}, {transform_indices = @transform_2, window_bounds = array<i64: 1, 8, 32>}, {transform_indices = @transform_3, window_bounds = array<i64: 1, 1, 32, 32>}, {transform_indices = @transform_4, window_bounds = array<i64: 1, 2, 32>}, {pipeline_mode = #tpu.pipeline_mode<synchronous>, transform_indices = @transform_5, window_bounds = array<i64: 4, 32, 32>}, {pipeline_mode = #tpu.pipeline_mode<synchronous>, transform_indices = @transform_6, window_bounds = array<i64: 4, 32>}, {transform_indices = @transform_7, window_bounds = array<i64: 7>}, {transform_indices = @transform_8, window_bounds = array<i64: 1, 2, 16, 32>}, {transform_indices = @transform_9, window_bounds = array<i64: 1, 2, 2, 32>}]} {
    %c0 = arith.constant 0 : index
    %c0_0 = arith.constant 0 : index
    %c0_1 = arith.constant 0 : index
    %c0_2 = arith.constant 0 : index
    %0 = vector.load %arg3[%c0, %c0_0, %c0_1, %c0_2] : memref<1x2x16x16xf32, #tpu.memory_space<vmem>>, vector<1x2x16x16xf32>
    %1 = vector.shape_cast %0 : vector<1x2x16x16xf32> to vector<2x16x16xf32>
    %c0_3 = arith.constant 0 : index
    %c0_4 = arith.constant 0 : index
    %c0_5 = arith.constant 0 : index
    %c0_6 = arith.constant 0 : index
    %2 = vector.load %arg2[%c0_3, %c0_4, %c0_5, %c0_6] : memref<1x2x16x8xf32, #tpu.memory_space<vmem>>, vector<1x2x16x8xf32>
    %3 = vector.shape_cast %2 : vector<1x2x16x8xf32> to vector<2x16x8xf32>
    %4 = vector.shape_cast %3 : vector<2x16x8xf32> to vector<32x8xf32>
    %c0_7 = arith.constant 0 : index
    %c0_8 = arith.constant 0 : index
    %c0_9 = arith.constant 0 : index
    %5 = vector.load %arg4[%c0_7, %c0_8, %c0_9] : memref<1x8x32xf32, #tpu.memory_space<vmem>>, vector<1x8x32xf32>
    %6 = vector.shape_cast %5 : vector<1x8x32xf32> to vector<8x32xf32>
    %c0_10 = arith.constant 0 : index
    %c0_11 = arith.constant 0 : index
    %c0_12 = arith.constant 0 : index
    %7 = vector.load %arg6[%c0_10, %c0_11, %c0_12] : memref<1x2x32xf32, #tpu.memory_space<vmem>>, vector<1x1x32xf32>
    %8 = vector.shape_cast %7 : vector<1x1x32xf32> to vector<1x32xf32>
    %c2_i32 = arith.constant 2 : i32
    %9 = arith.muli %arg0, %c2_i32 : i32
    %c0_i32 = arith.constant 0 : i32
    %10 = arith.addi %9, %c0_i32 : i32
    %11 = arith.index_cast %10 : i32 to index
    %12 = memref.load %arg9[%11] : memref<7xf32, #tpu.memory_space<smem>>
    %13 = vector.shape_cast %4 : vector<32x8xf32> to vector<2x16x8xf32>
    "tpu.trace_start"() <{level = 10 : i32, message = "gij,gjf->gif"}> : () -> ()
    %cst = arith.constant dense<0.000000e+00> : vector<2x16x8xf32>
    %14 = tpu.matmul %1, %13, %cst {dimension_numbers = #tpu.dot_dimension_numbers<[2], [1], [1], [2], [0, 0, 0, 1, 1, 2], [0], [0]>} : vector<2x16x16xf32>, vector<2x16x8xf32>, vector<2x16x8xf32> -> vector<2x16x8xf32>
    "tpu.trace_stop"() : () -> ()
    %15 = vector.shape_cast %14 : vector<2x16x8xf32> to vector<32x8xf32>
    %cst_13 = arith.constant dense<0.000000e+00> : vector<32x32xf32>
    %16 = tpu.matmul %15, %6, %cst_13 {dimension_numbers = #tpu.dot_dimension_numbers<[1], [0], [0], [1], [0, 0, 1, 1], [], []>} : vector<32x8xf32>, vector<8x32xf32>, vector<32x32xf32> -> vector<32x32xf32>
    %17 = vector.broadcast %8 : vector<1x32xf32> to vector<32x32xf32>
    %18 = arith.addf %16, %17 : vector<32x32xf32>
    %cst_14 = arith.constant 0.000000e+00 : f32
    %19 = vector.broadcast %cst_14 : f32 to vector<32x32xf32>
    %20 = arith.cmpf ogt, %18, %19 : vector<32x32xf32>
    %21 = vector.broadcast %12 : f32 to vector<32x32xf32>
    %22 = arith.mulf %21, %18 : vector<32x32xf32>
    %23 = arith.select %20, %18, %22 : vector<32x32xi1>, vector<32x32xf32>
    %24 = vector.shape_cast %23 : vector<32x32xf32> to vector<2x16x32xf32>
    %cst_15 = arith.constant dense<0.000000e+00> : vector<2x32xf32>
    %25 = vector.multi_reduction <add>, %24, %cst_15 [1] : vector<2x16x32xf32> to vector<2x32xf32>
    %26 = vector.shape_cast %25 : vector<2x32xf32> to vector<2x1x32xf32>
    %c0_16 = arith.constant 0 : index
    %c0_17 = arith.constant 0 : index
    %c0_18 = arith.constant 0 : index
    %c0_19 = arith.constant 0 : index
    %27 = vector.load %arg11[%c0_16, %c0_17, %c0_18, %c0_19] : memref<1x2x2x32xf32, #tpu.memory_space<vmem>>, vector<1x2x1x32xf32>
    %28 = vector.shape_cast %27 : vector<1x2x1x32xf32> to vector<2x1x32xf32>
    %29 = vector.shape_cast %26 : vector<2x1x32xf32> to vector<1x2x1x32xf32>
    tpu.vector_store %arg11[%c0_16, %c0_17, %c0_18, %c0_19], %29 {strides = array<i32>} : memref<1x2x2x32xf32, #tpu.memory_space<vmem>>, vector<1x2x1x32xf32>,
    %c0_20 = arith.constant 0 : index
    %c0_21 = arith.constant 0 : index
    %c0_22 = arith.constant 0 : index
    %c0_23 = arith.constant 0 : index
    %30 = vector.load %arg5[%c0_20, %c0_21, %c0_22, %c0_23] : memref<1x1x32x32xf32, #tpu.memory_space<vmem>>, vector<1x1x32x32xf32>
    %31 = vector.shape_cast %30 : vector<1x1x32x32xf32> to vector<32x32xf32>
    %c0_24 = arith.constant 0 : index
    %c1 = arith.constant 1 : index
    %c0_25 = arith.constant 0 : index
    %32 = vector.load %arg6[%c0_24, %c1, %c0_25] : memref<1x2x32xf32, #tpu.memory_space<vmem>>, vector<1x1x32xf32>
    %33 = vector.shape_cast %32 : vector<1x1x32xf32> to vector<1x32xf32>
    %c2_i32_26 = arith.constant 2 : i32
    %34 = arith.muli %arg0, %c2_i32_26 : i32
    %c1_i32 = arith.constant 1 : i32
    %35 = arith.addi %34, %c1_i32 : i32
    %36 = arith.index_cast %35 : i32 to index
    %37 = memref.load %arg9[%36] : memref<7xf32, #tpu.memory_space<smem>>
    %cst_27 = arith.constant dense<0.000000e+00> : vector<32x32xf32>
    %38 = tpu.matmul %23, %31, %cst_27 {dimension_numbers = #tpu.dot_dimension_numbers<[1], [0], [0], [1], [0, 0, 1, 1], [], []>} : vector<32x32xf32>, vector<32x32xf32>, vector<32x32xf32> -> vector<32x32xf32>
    %39 = vector.shape_cast %38 : vector<32x32xf32> to vector<2x16x32xf32>
    "tpu.trace_start"() <{level = 10 : i32, message = "gij,gjf->gif"}> : () -> ()
    %cst_28 = arith.constant dense<0.000000e+00> : vector<2x16x32xf32>
    %40 = tpu.matmul %1, %39, %cst_28 {dimension_numbers = #tpu.dot_dimension_numbers<[2], [1], [1], [2], [0, 0, 0, 1, 1, 2], [0], [0]>} : vector<2x16x16xf32>, vector<2x16x32xf32>, vector<2x16x32xf32> -> vector<2x16x32xf32>
    "tpu.trace_stop"() : () -> ()
    %41 = vector.shape_cast %40 : vector<2x16x32xf32> to vector<32x32xf32>
    %42 = vector.broadcast %33 : vector<1x32xf32> to vector<32x32xf32>
    %43 = arith.addf %41, %42 : vector<32x32xf32>
    %cst_29 = arith.constant 0.000000e+00 : f32
    %44 = vector.broadcast %cst_29 : f32 to vector<32x32xf32>
    %45 = arith.cmpf ogt, %43, %44 : vector<32x32xf32>
    %46 = vector.broadcast %37 : f32 to vector<32x32xf32>
    %47 = arith.mulf %46, %43 : vector<32x32xf32>
    %48 = arith.select %45, %43, %47 : vector<32x32xi1>, vector<32x32xf32>
    %49 = vector.shape_cast %48 : vector<32x32xf32> to vector<2x16x32xf32>
    %cst_30 = arith.constant dense<0.000000e+00> : vector<2x32xf32>
    %50 = vector.multi_reduction <add>, %49, %cst_30 [1] : vector<2x16x32xf32> to vector<2x32xf32>
    %51 = vector.shape_cast %50 : vector<2x32xf32> to vector<2x1x32xf32>
    %c0_31 = arith.constant 0 : index
    %c0_32 = arith.constant 0 : index
    %c1_33 = arith.constant 1 : index
    %c0_34 = arith.constant 0 : index
    %52 = vector.load %arg11[%c0_31, %c0_32, %c1_33, %c0_34] : memref<1x2x2x32xf32, #tpu.memory_space<vmem>>, vector<1x2x1x32xf32>
    %53 = vector.shape_cast %52 : vector<1x2x1x32xf32> to vector<2x1x32xf32>
    %54 = vector.shape_cast %51 : vector<2x1x32xf32> to vector<1x2x1x32xf32>
    tpu.vector_store %arg11[%c0_31, %c0_32, %c1_33, %c0_34], %54 {strides = array<i32>} : memref<1x2x2x32xf32, #tpu.memory_space<vmem>>, vector<1x2x1x32xf32>,
    %c4 = arith.constant 4 : index
    %55 = memref.load %arg9[%c4] : memref<7xf32, #tpu.memory_space<smem>>
    %c5 = arith.constant 5 : index
    %56 = memref.load %arg9[%c5] : memref<7xf32, #tpu.memory_space<smem>>
    %c6 = arith.constant 6 : index
    %57 = memref.load %arg9[%c6] : memref<7xf32, #tpu.memory_space<smem>>
    %c0_35 = arith.constant 0 : index
    %c0_36 = arith.constant 0 : index
    %c0_37 = arith.constant 0 : index
    %58 = vector.load %arg7[%c0_35, %c0_36, %c0_37] : memref<4x32x32xf32, #tpu.memory_space<vmem>>, vector<1x32x32xf32>
    %59 = vector.shape_cast %58 : vector<1x32x32xf32> to vector<32x32xf32>
    %c1_38 = arith.constant 1 : index
    %c0_39 = arith.constant 0 : index
    %c0_40 = arith.constant 0 : index
    %60 = vector.load %arg7[%c1_38, %c0_39, %c0_40] : memref<4x32x32xf32, #tpu.memory_space<vmem>>, vector<1x32x32xf32>
    %61 = vector.shape_cast %60 : vector<1x32x32xf32> to vector<32x32xf32>
    %c2 = arith.constant 2 : index
    %c0_41 = arith.constant 0 : index
    %c0_42 = arith.constant 0 : index
    %62 = vector.load %arg7[%c2, %c0_41, %c0_42] : memref<4x32x32xf32, #tpu.memory_space<vmem>>, vector<1x32x32xf32>
    %63 = vector.shape_cast %62 : vector<1x32x32xf32> to vector<32x32xf32>
    %c3 = arith.constant 3 : index
    %c0_43 = arith.constant 0 : index
    %c0_44 = arith.constant 0 : index
    %64 = vector.load %arg7[%c3, %c0_43, %c0_44] : memref<4x32x32xf32, #tpu.memory_space<vmem>>, vector<1x32x32xf32>
    %65 = vector.shape_cast %64 : vector<1x32x32xf32> to vector<32x32xf32>
    %c0_45 = arith.constant 0 : index
    %c0_46 = arith.constant 0 : index
    %66 = vector.load %arg8[%c0_45, %c0_46] : memref<4x32xf32, #tpu.memory_space<vmem>>, vector<1x32xf32>
    %c1_47 = arith.constant 1 : index
    %c0_48 = arith.constant 0 : index
    %67 = vector.load %arg8[%c1_47, %c0_48] : memref<4x32xf32, #tpu.memory_space<vmem>>, vector<1x32xf32>
    %c2_49 = arith.constant 2 : index
    %c0_50 = arith.constant 0 : index
    %68 = vector.load %arg8[%c2_49, %c0_50] : memref<4x32xf32, #tpu.memory_space<vmem>>, vector<1x32xf32>
    %c3_51 = arith.constant 3 : index
    %c0_52 = arith.constant 0 : index
    %69 = vector.load %arg8[%c3_51, %c0_52] : memref<4x32xf32, #tpu.memory_space<vmem>>, vector<1x32xf32>
    %cst_53 = arith.constant dense<0.000000e+00> : vector<32x32xf32>
    %70 = tpu.matmul %48, %59, %cst_53 {dimension_numbers = #tpu.dot_dimension_numbers<[1], [0], [0], [1], [0, 0, 1, 1], [], []>} : vector<32x32xf32>, vector<32x32xf32>, vector<32x32xf32> -> vector<32x32xf32>
    %71 = vector.broadcast %66 : vector<1x32xf32> to vector<32x32xf32>
    %72 = arith.addf %70, %71 : vector<32x32xf32>
    %cst_54 = arith.constant 0.000000e+00 : f32
    %73 = vector.broadcast %cst_54 : f32 to vector<32x32xf32>
    %74 = arith.cmpf ogt, %72, %73 : vector<32x32xf32>
    %75 = vector.broadcast %55 : f32 to vector<32x32xf32>
    %76 = arith.mulf %75, %72 : vector<32x32xf32>
    %77 = arith.select %74, %72, %76 : vector<32x32xi1>, vector<32x32xf32>
    %cst_55 = arith.constant dense<0.000000e+00> : vector<32x32xf32>
    %78 = tpu.matmul %77, %61, %cst_55 {dimension_numbers = #tpu.dot_dimension_numbers<[1], [0], [0], [1], [0, 0, 1, 1], [], []>} : vector<32x32xf32>, vector<32x32xf32>, vector<32x32xf32> -> vector<32x32xf32>
    %79 = vector.broadcast %67 : vector<1x32xf32> to vector<32x32xf32>
    %80 = arith.addf %78, %79 : vector<32x32xf32>
    %cst_56 = arith.constant 0.000000e+00 : f32
    %81 = vector.broadcast %cst_56 : f32 to vector<32x32xf32>
    %82 = arith.cmpf ogt, %80, %81 : vector<32x32xf32>
    %83 = vector.broadcast %56 : f32 to vector<32x32xf32>
    %84 = arith.mulf %83, %80 : vector<32x32xf32>
    %85 = arith.select %82, %80, %84 : vector<32x32xi1>, vector<32x32xf32>
    %cst_57 = arith.constant dense<0.000000e+00> : vector<32x32xf32>
    %86 = tpu.matmul %85, %63, %cst_57 {dimension_numbers = #tpu.dot_dimension_numbers<[1], [0], [0], [1], [0, 0, 1, 1], [], []>} : vector<32x32xf32>, vector<32x32xf32>, vector<32x32xf32> -> vector<32x32xf32>
    %87 = vector.broadcast %68 : vector<1x32xf32> to vector<32x32xf32>
    %88 = arith.addf %86, %87 : vector<32x32xf32>
    %cst_58 = arith.constant 0.000000e+00 : f32
    %89 = vector.broadcast %cst_58 : f32 to vector<32x32xf32>
    %90 = arith.cmpf ogt, %88, %89 : vector<32x32xf32>
    %91 = vector.broadcast %57 : f32 to vector<32x32xf32>
    %92 = arith.mulf %91, %88 : vector<32x32xf32>
    %93 = arith.select %90, %88, %92 : vector<32x32xi1>, vector<32x32xf32>
    %cst_59 = arith.constant dense<0.000000e+00> : vector<32x32xf32>
    %94 = tpu.matmul %48, %65, %cst_59 {dimension_numbers = #tpu.dot_dimension_numbers<[1], [0], [0], [1], [0, 0, 1, 1], [], []>} : vector<32x32xf32>, vector<32x32xf32>, vector<32x32xf32> -> vector<32x32xf32>
    %95 = arith.addf %93, %94 : vector<32x32xf32>
    %96 = vector.broadcast %69 : vector<1x32xf32> to vector<32x32xf32>
    %97 = arith.addf %95, %96 : vector<32x32xf32>
    %98 = vector.shape_cast %97 : vector<32x32xf32> to vector<2x16x32xf32>
    %c0_60 = arith.constant 0 : index
    %c0_61 = arith.constant 0 : index
    %c0_62 = arith.constant 0 : index
    %c0_63 = arith.constant 0 : index
    %99 = vector.load %arg10[%c0_60, %c0_61, %c0_62, %c0_63] : memref<1x2x16x32xf32, #tpu.memory_space<vmem>>, vector<1x2x16x32xf32>
    %100 = vector.shape_cast %99 : vector<1x2x16x32xf32> to vector<2x16x32xf32>
    %101 = vector.shape_cast %98 : vector<2x16x32xf32> to vector<1x2x16x32xf32>
    tpu.vector_store %arg10[%c0_60, %c0_61, %c0_62, %c0_63], %101 {strides = array<i32>} : memref<1x2x16x32xf32, #tpu.memory_space<vmem>>, vector<1x2x16x32xf32>,
    return
  }
  func.func @transform_0(%arg0: i32, %arg1: i32) -> (i32, i32, i32, i32) {
    %c0_i32 = arith.constant 0 : i32
    %c0_i32_0 = arith.constant 0 : i32
    %c0_i32_1 = arith.constant 0 : i32
    return %arg0, %arg1, %c0_i32, %c0_i32_0 : i32, i32, i32, i32
  }
  func.func @transform_1(%arg0: i32, %arg1: i32) -> (i32, i32, i32, i32) {
    %c0_i32 = arith.constant 0 : i32
    %c0_i32_0 = arith.constant 0 : i32
    %c0_i32_1 = arith.constant 0 : i32
    return %arg0, %arg1, %c0_i32, %c0_i32_0 : i32, i32, i32, i32
  }
  func.func @transform_2(%arg0: i32, %arg1: i32) -> (i32, i32, i32) {
    %c0_i32 = arith.constant 0 : i32
    %c0_i32_0 = arith.constant 0 : i32
    %c0_i32_1 = arith.constant 0 : i32
    return %arg0, %c0_i32, %c0_i32_0 : i32, i32, i32
  }
  func.func @transform_3(%arg0: i32, %arg1: i32) -> (i32, i32, i32, i32) {
    %c0_i32 = arith.constant 0 : i32
    %c0_i32_0 = arith.constant 0 : i32
    %c0_i32_1 = arith.constant 0 : i32
    %c0_i32_2 = arith.constant 0 : i32
    return %arg0, %c0_i32, %c0_i32_0, %c0_i32_1 : i32, i32, i32, i32
  }
  func.func @transform_4(%arg0: i32, %arg1: i32) -> (i32, i32, i32) {
    %c0_i32 = arith.constant 0 : i32
    %c0_i32_0 = arith.constant 0 : i32
    %c0_i32_1 = arith.constant 0 : i32
    return %arg0, %c0_i32, %c0_i32_0 : i32, i32, i32
  }
  func.func @transform_5(%arg0: i32, %arg1: i32) -> (i32, i32, i32) {
    %c0_i32 = arith.constant 0 : i32
    %c0_i32_0 = arith.constant 0 : i32
    %c0_i32_1 = arith.constant 0 : i32
    %c0_i32_2 = arith.constant 0 : i32
    return %c0_i32, %c0_i32_0, %c0_i32_1 : i32, i32, i32
  }
  func.func @transform_6(%arg0: i32, %arg1: i32) -> (i32, i32) {
    %c0_i32 = arith.constant 0 : i32
    %c0_i32_0 = arith.constant 0 : i32
    %c0_i32_1 = arith.constant 0 : i32
    return %c0_i32, %c0_i32_0 : i32, i32
  }
  func.func @transform_7(%arg0: i32, %arg1: i32) -> i32 {
    %c0_i32 = arith.constant 0 : i32
    %c0_i32_0 = arith.constant 0 : i32
    return %c0_i32 : i32
  }
  func.func @transform_8(%arg0: i32, %arg1: i32) -> (i32, i32, i32, i32) {
    %c0_i32 = arith.constant 0 : i32
    %c0_i32_0 = arith.constant 0 : i32
    %c0_i32_1 = arith.constant 0 : i32
    return %arg0, %arg1, %c0_i32, %c0_i32_0 : i32, i32, i32, i32
  }
  func.func @transform_9(%arg0: i32, %arg1: i32) -> (i32, i32, i32, i32) {
    %c0_i32 = arith.constant 0 : i32
    %c0_i32_0 = arith.constant 0 : i32
    %c0_i32_1 = arith.constant 0 : i32
    return %arg0, %arg1, %c0_i32, %c0_i32_0 : i32, i32, i32, i32
  }
}

</mosaic_0001>

<llo_original>
// kernel: model_forward.1
$region0: #{model_forward.1}
  #allocation0 [shape = 'u32[]', space=smem, size = 0x4, offset = 0x4, fixed_abs, tag = 'smem constant byte address 0x4 - core index']
  #allocation1 [shape = 'u32[144,128]{1,0:T(1,128)}', space=vmem, size = 0x12000, scoped, tag = 'internal scratch']
  %s0 = inlined_call_operand.vmem [shape: f32[2,2,16,8], index: 0, kind: input, shape index: {}]
  %s1 = inlined_call_operand.vmem [shape: f32[2,2,16,16], index: 1, kind: input, shape index: {}]
  %s2 = inlined_call_operand.vmem [shape: f32[2,8,32], index: 2, kind: input, shape index: {}]
  %s3 = inlined_call_operand.hbm [shape: f32[2,1,32,32], index: 3, kind: input, shape index: {}]
  %s4 = inlined_call_operand.vmem [shape: f32[2,2,32], index: 4, kind: input, shape index: {}]
  %s5 = inlined_call_operand.hbm [shape: f32[4,32,32], index: 5, kind: input, shape index: {}]
  %s6 = inlined_call_operand.vmem [shape: f32[4,32], index: 6, kind: input, shape index: {}]
  %s7 = inlined_call_operand.vmem [shape: f32[7], index: 7, kind: input, shape index: {}]
  %s8 = inlined_call_operand.vmem [shape: f32[2,2,16,32], index: 8, kind: output, shape index: {0}]
  %s9 = inlined_call_operand.vmem [shape: f32[2,2,2,32], index: 9, kind: output, shape index: {1}]
  %10 = xla_tuple %s8, %s9
  %s11 = sld [smem:[#allocation0]]
  $region85: #{model_forward.1} parent=0
    _
  %s13 = ssub.s32 1, %s11
  %s14 = scalar_select 0, %s13, %s11
  $region1: #{model_forward.1} parent=0
    #allocation2 [shape = 'u8[32768]{0}', space=vmem, size = 0x8000, scoped, tag = 'input window, operand 3']
    #allocation3 [shape = 's32[2]{0}', space=sflag, size = 0x8, scoped, tag = 'scoped memory for model_forward.1']
    #allocation4 [shape = 's32[2]{0}', space=sflag, size = 0x8, scoped, tag = 'scoped memory for model_forward.1']
    #allocation5 [shape = 'u8[65536]{0}', space=vmem, size = 0x10000, scoped, tag = 'input window, operand 5, single buffered']
    #allocation6 [shape = 's32[1]{0}', space=sflag, size = 0x4, scoped, tag = 'scoped memory for model_forward.1']
    #allocation7 [shape = 'u8[512]{0}', space=smem, size = 0x200, scoped, tag = 'input window, operand 7, single buffered']
    %15 = vsyncpa [#allocation3], 0
    %s16 = scalar_lea.sflag [#allocation3], 1
    %17 = vsyncpa %s16, 0
    %18 = vsyncpa [#allocation6], 0
    %19 = vsyncpa [#allocation4], 0
    loop: start=0, step=1, limit=4
    $region2: #{model_forward.1} parent=1 // loop_pre_header
      _
    $region3: #{model_forward.1} parent=1 // loop_header
      %s21 = sphi 0, %s25
      %p22 = scmp.ge.s32.totalorder %s21, 4
      %s28 = sphi 0, %s40
      %s29 = sphi 0, %s36
      %s30 = sphi 0, %s28
      %s31 = sphi 0, %s29
      %s32 = sphi 0, %s30
      %s33 = sphi 0, %s31
      %s45 = sphi 0, %s47
      %s48 = sphi 0, %s45
      %s49 = sphi 0, %s48
      %s65 = sphi 0, %s49
      %s73 = sphi 0, %s75
      %s76 = sphi 0, %s73
      %s77 = sphi 0, %s76
      %s93 = sphi 0, %s77
      %s99 = sphi 0, %s101
      %s102 = sphi 0, %s99
      %s103 = sphi 0, %s102
      %s119 = sphi 0, %s103
      %s125 = sphi 0, %s127
      %s128 = sphi 0, %s125
      %s129 = sphi 0, %s128
      %s145 = sphi 0, %s129
      %s151 = sphi 0, %s153
      %s154 = sphi 0, %s151
      %s155 = sphi 0, %s154
      %s171 = sphi 0, %s155
      %s175 = sphi 0, %s175
      %s177 = sphi 0, %s175
      %s178 = sphi 0, %s177
      %s192 = sphi 0, %s178
      %s196 = sphi 0, %s196
      %s198 = sphi 0, %s196
      %s199 = sphi 0, %s198
      %s213 = sphi 0, %s199
      %s217 = sphi 0, %s217
      %s219 = sphi 0, %s217
      %s220 = sphi 0, %s219
      %s234 = sphi 0, %s220
      %s242 = sphi 0, %s244
      %s245 = sphi 0, %s242
      %s246 = sphi 0, %s245
      %s262 = sphi 0, %s246
      %s270 = sphi 0, %s272
      %s273 = sphi 0, %s270
      %s274 = sphi 0, %s273
      %s290 = sphi 0, %s274
    $region4: #{model_forward.1} parent=1 // loop_header_branch
      %24 = sbr.rel (%p22) target = $region8
    $region5: #{model_forward.1} parent=1 // loop_body
      %s26 = ssub.s32 %s21, 1
      %s27 = ssub.s32 %s21, 2
      %s34 = sadd.s32 1, %s29
      %p35 = scmp.ge.s32.totalorder %s34, 1
      %s36 = scalar_select %p35, 0, %s34
      %s37 = sadd.s32 1, %s28
      %s38 = scalar_select %p35, %s37, %s28
      %p39 = scmp.ge.s32.totalorder %s38, 2
      %s40 = scalar_select %p39, 0, %s38
      %s41 = ssub.s32 %s28, %s40
      %s42 = ssub.s32 %s29, %s36
      %s43 = sor.u32 %s41, %s42
      %p44 = scmp.eq.s32.totalorder %s43, 0
      %s46 = sadd.s32 %s45, 1
      %s47 = scalar_select %p44, %s45, %s46
      %p50 = pneg %p44
      %p51 = scmp.eq.s32.totalorder %s21, 1
      %p52 = por %p50, %p51
      %p53 = scmp.ne.s32.totalorder %s45, %s48
      %p54 = scmp.eq.s32.totalorder %s21, 0
      %p55 = por %p53, %p54
      %p56 = scmp.ne.s32.totalorder %s45, %s48
      %p57 = scmp.eq.s32.totalorder %s26, 1
      %p58 = por %p56, %p57
      %p59 = scmp.ne.s32.totalorder %s48, %s49
      %p60 = scmp.eq.s32.totalorder %s26, 0
      %p61 = por %p59, %p60
      %p62 = scmp.ne.s32.totalorder %s48, %s49
      %p63 = scmp.eq.s32.totalorder %s27, 1
      %p64 = por %p62, %p63
      %p66 = scmp.ne.s32.totalorder %s49, %s65
      %p67 = scmp.eq.s32.totalorder %s27, 0
      %p68 = por %p66, %p67
      %s69 = ssub.s32 %s28, %s40
      %s70 = ssub.s32 %s29, %s36
      %s71 = sor.u32 %s69, %s70
      %p72 = scmp.eq.s32.totalorder %s71, 0
      %s74 = sadd.s32 %s73, 1
      %s75 = scalar_select %p72, %s73, %s74
      %p78 = pneg %p72
      %p79 = scmp.eq.s32.totalorder %s21, 1
      %p80 = por %p78, %p79
      %p81 = scmp.ne.s32.totalorder %s73, %s76
      %p82 = scmp.eq.s32.totalorder %s21, 0
      %p83 = por %p81, %p82
      %p84 = scmp.ne.s32.totalorder %s73, %s76
      %p85 = scmp.eq.s32.totalorder %s26, 1
      %p86 = por %p84, %p85
      %p87 = scmp.ne.s32.totalorder %s76, %s77
      %p88 = scmp.eq.s32.totalorder %s26, 0
      %p89 = por %p87, %p88
      %p90 = scmp.ne.s32.totalorder %s76, %s77
      %p91 = scmp.eq.s32.totalorder %s27, 1
      %p92 = por %p90, %p91
      %p94 = scmp.ne.s32.totalorder %s77, %s93
      %p95 = scmp.eq.s32.totalorder %s27, 0
      %p96 = por %p94, %p95
      %s97 = ssub.s32 %s28, %s40
      %p98 = scmp.eq.s32.totalorder %s97, 0
      %s100 = sadd.s32 %s99, 1
      %s101 = scalar_select %p98, %s99, %s100
      %p104 = pneg %p98
      %p105 = scmp.eq.s32.totalorder %s21, 1
      %p106 = por %p104, %p105
      %p107 = scmp.ne.s32.totalorder %s99, %s102
      %p108 = scmp.eq.s32.totalorder %s21, 0
      %p109 = por %p107, %p108
      %p110 = scmp.ne.s32.totalorder %s99, %s102
      %p111 = scmp.eq.s32.totalorder %s26, 1
      %p112 = por %p110, %p111
      %p113 = scmp.ne.s32.totalorder %s102, %s103
      %p114 = scmp.eq.s32.totalorder %s26, 0
      %p115 = por %p113, %p114
      %p116 = scmp.ne.s32.totalorder %s102, %s103
      %p117 = scmp.eq.s32.totalorder %s27, 1
      %p118 = por %p116, %p117
      %p120 = scmp.ne.s32.totalorder %s103, %s119
      %p121 = scmp.eq.s32.totalorder %s27, 0
      %p122 = por %p120, %p121
      %s123 = ssub.s32 %s28, %s40
      %p124 = scmp.eq.s32.totalorder %s123, 0
      %s126 = sadd.s32 %s125, 1
      %s127 = scalar_select %p124, %s125, %s126
      %p130 = pneg %p124
      %p131 = scmp.eq.s32.totalorder %s21, 1
      %p132 = por %p130, %p131
      %p133 = scmp.ne.s32.totalorder %s125, %s128
      %p134 = scmp.eq.s32.totalorder %s21, 0
      %p135 = por %p133, %p134
      %p136 = scmp.ne.s32.totalorder %s125, %s128
      %p137 = scmp.eq.s32.totalorder %s26, 1
      %p138 = por %p136, %p137
      %p139 = scmp.ne.s32.totalorder %s128, %s129
      %p140 = scmp.eq.s32.totalorder %s26, 0
      %p141 = por %p139, %p140
      %p142 = scmp.ne.s32.totalorder %s128, %s129
      %p143 = scmp.eq.s32.totalorder %s27, 1
      %p144 = por %p142, %p143
      %p146 = scmp.ne.s32.totalorder %s129, %s145
      %p147 = scmp.eq.s32.totalorder %s27, 0
      %p148 = por %p146, %p147
      %s149 = ssub.s32 %s28, %s40
      %p150 = scmp.eq.s32.totalorder %s149, 0
      %s152 = sadd.s32 %s151, 1
      %s153 = scalar_select %p150, %s151, %s152
      %p156 = pneg %p150
      %p157 = scmp.eq.s32.totalorder %s21, 1
      %p158 = por %p156, %p157
      %p159 = scmp.ne.s32.totalorder %s151, %s154
      %p160 = scmp.eq.s32.totalorder %s21, 0
      %p161 = por %p159, %p160
      %p162 = scmp.ne.s32.totalorder %s151, %s154
      %p163 = scmp.eq.s32.totalorder %s26, 1
      %p164 = por %p162, %p163
      %p165 = scmp.ne.s32.totalorder %s154, %s155
      %p166 = scmp.eq.s32.totalorder %s26, 0
      %p167 = por %p165, %p166
      %p168 = scmp.ne.s32.totalorder %s154, %s155
      %p169 = scmp.eq.s32.totalorder %s27, 1
      %p170 = por %p168, %p169
      %p172 = scmp.ne.s32.totalorder %s155, %s171
      %p173 = scmp.eq.s32.totalorder %s27, 0
      %p174 = por %p172, %p173
      %s176 = sadd.s32 %s175, 1
      %p179 = scmp.eq.s32.totalorder %s21, 1
      %p180 = scmp.ne.s32.totalorder %s175, %s177
      %p181 = scmp.eq.s32.totalorder %s21, 0
      %p182 = por %p180, %p181
      %p183 = scmp.ne.s32.totalorder %s175, %s177
      %p184 = scmp.eq.s32.totalorder %s26, 1
      %p185 = por %p183, %p184
      %p186 = scmp.ne.s32.totalorder %s177, %s178
      %p187 = scmp.eq.s32.totalorder %s26, 0
      %p188 = por %p186, %p187
      %p189 = scmp.ne.s32.totalorder %s177, %s178
      %p190 = scmp.eq.s32.totalorder %s27, 1
      %p191 = por %p189, %p190
      %p193 = scmp.ne.s32.totalorder %s178, %s192
      %p194 = scmp.eq.s32.totalorder %s27, 0
      %p195 = por %p193, %p194
      %s197 = sadd.s32 %s196, 1
      %p200 = scmp.eq.s32.totalorder %s21, 1
      %p201 = scmp.ne.s32.totalorder %s196, %s198
      %p202 = scmp.eq.s32.totalorder %s21, 0
      %p203 = por %p201, %p202
      %p204 = scmp.ne.s32.totalorder %s196, %s198
      %p205 = scmp.eq.s32.totalorder %s26, 1
      %p206 = por %p204, %p205
      %p207 = scmp.ne.s32.totalorder %s198, %s199
      %p208 = scmp.eq.s32.totalorder %s26, 0
      %p209 = por %p207, %p208
      %p210 = scmp.ne.s32.totalorder %s198, %s199
      %p211 = scmp.eq.s32.totalorder %s27, 1
      %p212 = por %p210, %p211
      %p214 = scmp.ne.s32.totalorder %s199, %s213
      %p215 = scmp.eq.s32.totalorder %s27, 0
      %p216 = por %p214, %p215
      %s218 = sadd.s32 %s217, 1
      %p221 = scmp.eq.s32.totalorder %s21, 1
      %p222 = scmp.ne.s32.totalorder %s217, %s219
      %p223 = scmp.eq.s32.totalorder %s21, 0
      %p224 = por %p222, %p223
      %p225 = scmp.ne.s32.totalorder %s217, %s219
      %p226 = scmp.eq.s32.totalorder %s26, 1
      %p227 = por %p225, %p226
      %p228 = scmp.ne.s32.totalorder %s219, %s220
      %p229 = scmp.eq.s32.totalorder %s26, 0
      %p230 = por %p228, %p229
      %p231 = scmp.ne.s32.totalorder %s219, %s220
      %p232 = scmp.eq.s32.totalorder %s27, 1
      %p233 = por %p231, %p232
      %p235 = scmp.ne.s32.totalorder %s220, %s234
      %p236 = scmp.eq.s32.totalorder %s27, 0
      %p237 = por %p235, %p236
      %s238 = ssub.s32 %s28, %s40
      %s239 = ssub.s32 %s29, %s36
      %s240 = sor.u32 %s238, %s239
      %p241 = scmp.eq.s32.totalorder %s240, 0
      %s243 = sadd.s32 %s242, 1
      %s244 = scalar_select %p241, %s242, %s243
      %p247 = pneg %p241
      %p248 = scmp.eq.s32.totalorder %s21, 1
      %p249 = por %p247, %p248
      %p250 = scmp.ne.s32.totalorder %s242, %s245
      %p251 = scmp.eq.s32.totalorder %s21, 0
      %p252 = por %p250, %p251
      %p253 = scmp.ne.s32.totalorder %s242, %s245
      %p254 = scmp.eq.s32.totalorder %s26, 1
      %p255 = por %p253, %p254
      %p256 = scmp.ne.s32.totalorder %s245, %s246
      %p257 = scmp.eq.s32.totalorder %s26, 0
      %p258 = por %p256, %p257
      %p259 = scmp.ne.s32.totalorder %s245, %s246
      %p260 = scmp.eq.s32.totalorder %s27, 1
      %p261 = por %p259, %p260
      %p263 = scmp.ne.s32.totalorder %s246, %s262
      %p264 = scmp.eq.s32.totalorder %s27, 0
      %p265 = por %p263, %p264
      %s266 = ssub.s32 %s28, %s40
      %s267 = ssub.s32 %s29, %s36
      %s268 = sor.u32 %s266, %s267
      %p269 = scmp.eq.s32.totalorder %s268, 0
      %s271 = sadd.s32 %s270, 1
      %s272 = scalar_select %p269, %s270, %s271
      %p275 = pneg %p269
      %p276 = scmp.eq.s32.totalorder %s21, 1
      %p277 = por %p275, %p276
      %p278 = scmp.ne.s32.totalorder %s270, %s273
      %p279 = scmp.eq.s32.totalorder %s21, 0
      %p280 = por %p278, %p279
      %p281 = scmp.ne.s32.totalorder %s270, %s273
      %p282 = scmp.eq.s32.totalorder %s26, 1
      %p283 = por %p281, %p282
      %p284 = scmp.ne.s32.totalorder %s273, %s274
      %p285 = scmp.eq.s32.totalorder %s26, 0
      %p286 = por %p284, %p285
      %p287 = scmp.ne.s32.totalorder %s273, %s274
      %p288 = scmp.eq.s32.totalorder %s27, 1
      %p289 = por %p287, %p288
      %p291 = scmp.ne.s32.totalorder %s274, %s290
      %p292 = scmp.eq.s32.totalorder %s27, 0
      %p293 = por %p291, %p292
      %p294 = scmp.le.s32.totalorder 1, %s21
      %p295 = scmp.lt.s32.totalorder %s21, 3
      %p296 = pnand %p294, %p295
      %p297 = pneg %p296
      // Predicated region
      $region9: #{model_forward.1} parent=5 // pred_check
        _
      $region10: #{model_forward.1} parent=5 // pred_check_branch
        %299 = sbr.rel (%p296) target = $region12
      $region11: #{model_forward.1} parent=5 // pred_region
        %s300 = ssub.s32 %s21, 1
        // Predicated region
        $region13: #{model_forward.1} parent=11 // pred_check
          %p301 = pneg %p188
        $region14: #{model_forward.1} parent=11 // pred_check_branch
          %303 = sbr.rel (%p301) target = $region16
        $region15: #{model_forward.1} parent=11 // pred_region
          %s305 = ssub.s32 2048, 2048
          %306 = vsyncadd [#allocation6], %s305
          %s307 = sshll.u32 [#allocation5], 4
          %s308 = int_to_ptr.vmem [resolvable:$true] %s307
          %313 = dma.hbm_to_vmem [thread:$0]  %s5, 2048, %s308, [#allocation6], 128, 128, 8
        $region16: #{model_forward.1} parent=11 // pred_fallthru
          _
        // Predicated region
        $region17: #{model_forward.1} parent=11 // pred_check
          %p314 = pneg %p209
        $region18: #{model_forward.1} parent=11 // pred_check_branch
          %316 = sbr.rel (%p314) target = $region20
        $region19: #{model_forward.1} parent=11 // pred_region
          _
        $region20: #{model_forward.1} parent=11 // pred_fallthru
          _
        // Predicated region
        $region21: #{model_forward.1} parent=11 // pred_check
          %p317 = pneg %p230
        $region22: #{model_forward.1} parent=11 // pred_check_branch
          %319 = sbr.rel (%p317) target = $region24
        $region23: #{model_forward.1} parent=11 // pred_region
          %s321 = ssub.s32 16, 16
          %322 = vsyncadd [#allocation4], %s321
          %s324 = sshll.u32 %s7, 4
          %s325 = int_to_ptr.vmem [resolvable:$true] %s324
          %327 = dma.vmem_to_smem %s325, 16, [#allocation7], [#allocation4]
        $region24: #{model_forward.1} parent=11 // pred_fallthru
          _
      $region12: #{model_forward.1} parent=5 // pred_fallthru
        _
      %p328 = scmp.lt.s32.totalorder %s21, 2
      // Predicated region
      $region25: #{model_forward.1} parent=5 // pred_check
        %p329 = pneg %p328
      $region26: #{model_forward.1} parent=5 // pred_check_branch
        %331 = sbr.rel (%p329) target = $region28
      $region27: #{model_forward.1} parent=5 // pred_region
        // Predicated region
        $region29: #{model_forward.1} parent=27 // pred_check
          %p332 = pneg %p55
        $region30: #{model_forward.1} parent=27 // pred_check_branch
          %334 = sbr.rel (%p332) target = $region32
        $region31: #{model_forward.1} parent=27 // pred_region
          %s335 = smul.u32 2, %s29
          %p336 = scmp.lt.s32.totalorder %s28, 1
          %s337 = scalar_select %p336, %s28, 1
          %p338 = scmp.lt.s32.totalorder %s335, 1
          %s339 = scalar_select %p338, %s335, 1
          %s340 = smul.addr %s339, 2
          %s341 = smul.addr %s337, 4
          %s342 = sadd.s32 %s340, %s341
          %s343 = smul.addr %s342, 8
          %s344 = scalar_lea.vmem %s0, %s343
          %s345 = smul.u32 2, %s29
        $region32: #{model_forward.1} parent=27 // pred_fallthru
          _
        // Predicated region
        $region33: #{model_forward.1} parent=27 // pred_check
          %p346 = pneg %p83
        $region34: #{model_forward.1} parent=27 // pred_check_branch
          %348 = sbr.rel (%p346) target = $region36
        $region35: #{model_forward.1} parent=27 // pred_region
          %s349 = smul.u32 2, %s29
          %p350 = scmp.lt.s32.totalorder %s28, 1
          %s351 = scalar_select %p350, %s28, 1
          %p352 = scmp.lt.s32.totalorder %s349, 1
          %s353 = scalar_select %p352, %s349, 1
          %s354 = smul.addr %s353, 2
          %s355 = smul.addr %s351, 4
          %s356 = sadd.s32 %s354, %s355
          %s357 = smul.addr %s356, 8
          %s358 = scalar_lea.vmem %s1, %s357
          %s359 = smul.u32 2, %s29
        $region36: #{model_forward.1} parent=27 // pred_fallthru
          _
        // Predicated region
        $region37: #{model_forward.1} parent=27 // pred_check
          %p360 = pneg %p109
        $region38: #{model_forward.1} parent=27 // pred_check_branch
          %362 = sbr.rel (%p360) target = $region40
        $region39: #{model_forward.1} parent=27 // pred_region
          %p363 = scmp.lt.s32.totalorder %s28, 1
          %s364 = scalar_select %p363, %s28, 1
          %s365 = smul.addr %s364, 8
          %s366 = scalar_lea.vmem %s2, %s365
        $region40: #{model_forward.1} parent=27 // pred_fallthru
          _
        // Predicated region
        $region41: #{model_forward.1} parent=27 // pred_check
          %p367 = pneg %p135
        $region42: #{model_forward.1} parent=27 // pred_check_branch
          %369 = sbr.rel (%p367) target = $region44
        $region43: #{model_forward.1} parent=27 // pred_region
          %s370 = sand.u32 %s125, 1
          %s371 = scalar_lea.sflag [#allocation3], %s370
          %s372 = sand.u32 %s125, 1
          %s373 = smul.addr %s372, 32
          %s374 = scalar_lea.vmem [#allocation2], %s373
          %s376 = ssub.s32 512, 512
          %377 = vsyncadd %s371, %s376
          %s378 = smul.addr %s28, 4
          %s379 = smul.addr %s378, 128
          %s380 = scalar_lea.hbm %s3, %s379
          %s381 = sshll.u32 %s374, 4
          %s382 = int_to_ptr.vmem [resolvable:$true] %s381
          %387 = dma.hbm_to_vmem [thread:$0]  %s380, 512, %s382, %s371, 128, 128, 8
        $region44: #{model_forward.1} parent=27 // pred_fallthru
          _
        // Predicated region
        $region45: #{model_forward.1} parent=27 // pred_check
          %p388 = pneg %p161
        $region46: #{model_forward.1} parent=27 // pred_check_branch
          %390 = sbr.rel (%p388) target = $region48
        $region47: #{model_forward.1} parent=27 // pred_region
          %p391 = scmp.lt.s32.totalorder %s28, 1
          %s392 = scalar_select %p391, %s28, 1
          %s393 = smul.addr %s392, 2
          %s394 = scalar_lea.vmem %s4, %s393
        $region48: #{model_forward.1} parent=27 // pred_fallthru
          _
      $region28: #{model_forward.1} parent=5 // pred_fallthru
        _
      %p395 = scmp.le.s32.totalorder 1, %s21
      %p396 = scmp.lt.s32.totalorder %s21, 3
      %p397 = pnand %p395, %p396
      %p398 = pneg %p397
      // Predicated region
      $region49: #{model_forward.1} parent=5 // pred_check
        _
      $region50: #{model_forward.1} parent=5 // pred_check_branch
        %400 = sbr.rel (%p397) target = $region52
      $region51: #{model_forward.1} parent=5 // pred_region
        %s401 = ssub.s32 %s21, 1
        %s402 = sand.u32 %s128, 1
        %s403 = scalar_lea.sflag [#allocation3], %s402
        %s404 = sand.u32 %s128, 1
        %s405 = smul.addr %s404, 32
        %s406 = scalar_lea.vmem [#allocation2], %s405
        // Predicated region
        $region53: #{model_forward.1} parent=51 // pred_check
          %p407 = pneg %p141
        $region54: #{model_forward.1} parent=51 // pred_check_branch
          %409 = sbr.rel (%p407) target = $region56
        $region55: #{model_forward.1} parent=51 // pred_region
          %410 = dma.done %s403, 512
        $region56: #{model_forward.1} parent=51 // pred_fallthru
          _
        // Predicated region
        $region57: #{model_forward.1} parent=51 // pred_check
          %p411 = pneg %p188
        $region58: #{model_forward.1} parent=51 // pred_check_branch
          %413 = sbr.rel (%p411) target = $region60
        $region59: #{model_forward.1} parent=51 // pred_region
          %414 = dma.done [#allocation6], 2048
        $region60: #{model_forward.1} parent=51 // pred_fallthru
          _
        // Predicated region
        $region61: #{model_forward.1} parent=51 // pred_check
          %p415 = pneg %p230
        $region62: #{model_forward.1} parent=51 // pred_check_branch
          %417 = sbr.rel (%p415) target = $region64
        $region63: #{model_forward.1} parent=51 // pred_region
          %418 = dma.done [#allocation4], 16
        $region64: #{model_forward.1} parent=51 // pred_fallthru
          _
        %419 = sfence
        %s420 = smul.u32 2, %s31
        %p421 = scmp.lt.s32.totalorder %s30, 1
        %s422 = scalar_select %p421, %s30, 1
        %p423 = scmp.lt.s32.totalorder %s420, 1
        %s424 = scalar_select %p423, %s420, 1
        %s425 = smul.addr %s424, 2
        %s426 = smul.addr %s422, 4
        %s427 = sadd.s32 %s425, %s426
        %s428 = smul.addr %s427, 8
        %s429 = scalar_lea.vmem %s0, %s428
        %p430 = pneg %p61
        %p431 = pneg %p58
        %s432 = smul.u32 2, %s31
        %p433 = scmp.lt.s32.totalorder %s30, 1
        %s434 = scalar_select %p433, %s30, 1
        %p435 = scmp.lt.s32.totalorder %s432, 1
        %s436 = scalar_select %p435, %s432, 1
        %s437 = smul.addr %s436, 2
        %s438 = smul.addr %s434, 4
        %s439 = sadd.s32 %s437, %s438
        %s440 = smul.addr %s439, 8
        %s441 = scalar_lea.vmem %s1, %s440
        %p442 = pneg %p89
        %p443 = pneg %p86
        %p444 = scmp.lt.s32.totalorder %s30, 1
        %s445 = scalar_select %p444, %s30, 1
        %s446 = smul.addr %s445, 8
        %s447 = scalar_lea.vmem %s2, %s446
        %p448 = pneg %p115
        %p449 = pneg %p112
        %s450 = sand.u32 %s128, 1
        %s451 = scalar_lea.sflag [#allocation3], %s450
        %s452 = sand.u32 %s128, 1
        %s453 = smul.addr %s452, 32
        %s454 = scalar_lea.vmem [#allocation2], %s453
        %p455 = pneg %p141
        %p456 = pneg %p138
        %p457 = scmp.lt.s32.totalorder %s30, 1
        %s458 = scalar_select %p457, %s30, 1
        %s459 = smul.addr %s458, 2
        %s460 = scalar_lea.vmem %s4, %s459
        %p461 = pneg %p167
        %p462 = pneg %p164
        %p463 = pneg %p188
        %p464 = pneg %p185
        %p465 = pneg %p209
        %p466 = pneg %p206
        %p467 = pneg %p230
        %p468 = pneg %p227
        %p469 = pneg %p258
        %p470 = pneg %p255
        %s471 = smul.u32 2, %s31
        %p472 = scmp.lt.s32.totalorder %s30, 1
        %s473 = scalar_select %p472, %s30, 1
        %p474 = scmp.lt.s32.totalorder %s471, 1
        %s475 = scalar_select %p474, %s471, 1
        %s476 = smul.addr %s475, 2
        %s477 = smul.addr %s473, 4
        %s478 = sadd.s32 %s476, %s477
        %s479 = smul.addr %s478, 8
        %s480 = scalar_lea.vmem %s8, %s479
        %p481 = pneg %p286
        %p482 = pneg %p283
        %s483 = smul.u32 2, %s31
        %p484 = scmp.lt.s32.totalorder %s30, 1
        %s485 = scalar_select %p484, %s30, 1
        %p486 = scmp.lt.s32.totalorder %s483, 1
        %s487 = scalar_select %p486, %s483, 1
        %s488 = smul.addr %s485, 2
        %s489 = sadd.s32 %s487, %s488
        %s490 = smul.addr %s489, 2
        %s491 = scalar_lea.vmem %s9, %s490
        %s492 = smul.u32 2, %s31
        %p493 = scmp.lt.s32.totalorder %s30, 1
        %s494 = scalar_select %p493, %s30, 1
        %p495 = scmp.lt.s32.totalorder %s492, 1
        %s496 = scalar_select %p495, %s492, 1
        %s497 = smul.addr %s496, 2
        %s498 = smul.addr %s494, 4
        %s499 = sadd.s32 %s497, %s498
        %s500 = smul.addr %s499, 8
        %s501 = scalar_lea.vmem %s0, %s500
        %s502 = smul.u32 2, %s31
        %s503 = smul.u32 2, %s31
        %p504 = scmp.lt.s32.totalorder %s30, 1
        %s505 = scalar_select %p504, %s30, 1
        %p506 = scmp.lt.s32.totalorder %s503, 1
        %s507 = scalar_select %p506, %s503, 1
        %s508 = smul.addr %s507, 2
        %s509 = smul.addr %s505, 4
        %s510 = sadd.s32 %s508, %s509
        %s511 = smul.addr %s510, 8
        %s512 = scalar_lea.vmem %s1, %s511
        %s513 = smul.u32 2, %s31
        %p514 = scmp.lt.s32.totalorder %s30, 1
        %s515 = scalar_select %p514, %s30, 1
        %s516 = smul.addr %s515, 8
        %s517 = scalar_lea.vmem %s2, %s516
        %p518 = scmp.lt.s32.totalorder %s30, 1
        %s519 = scalar_select %p518, %s30, 1
        %s520 = smul.addr %s519, 2
        %s521 = scalar_lea.vmem %s4, %s520
        %s522 = smul.u32 2, %s31
        %p523 = scmp.lt.s32.totalorder %s30, 1
        %s524 = scalar_select %p523, %s30, 1
        %p525 = scmp.lt.s32.totalorder %s522, 1
        %s526 = scalar_select %p525, %s522, 1
        %s527 = smul.addr %s526, 2
        %s528 = smul.addr %s524, 4
        %s529 = sadd.s32 %s527, %s528
        %s530 = smul.addr %s529, 8
        %s531 = scalar_lea.vmem %s8, %s530
        %s532 = smul.u32 2, %s31
        %s533 = smul.u32 2, %s31
        %p534 = scmp.lt.s32.totalorder %s30, 1
        %s535 = scalar_select %p534, %s30, 1
        %p536 = scmp.lt.s32.totalorder %s533, 1
        %s537 = scalar_select %p536, %s533, 1
        %s538 = smul.addr %s535, 2
        %s539 = sadd.s32 %s537, %s538
        %s540 = smul.addr %s539, 2
        %s541 = scalar_lea.vmem %s9, %s540
        %s542 = smul.u32 2, %s31
        %v543 = vld [vmem:[%s512] sm:$0xff]
        %v544 = vld [vmem:[%s512 + $0x8] sm:$0xff]
        %v545 = vld [vmem:[%s512 + $0x10] sm:$0xff]
        %v546 = vld [vmem:[%s512 + $0x18] sm:$0xff]
        %v547 = vld [vmem:[%s501] sm:$0xff]
        %v548 = vld [vmem:[%s501 + $0x8] sm:$0xff]
        %v549 = vld [vmem:[%s501 + $0x10] sm:$0xff]
        %v550 = vld [vmem:[%s501 + $0x18] sm:$0xff]
        %v551 = vld [vmem:[%s517] sm:$0xff]
        %v552 = vld [vmem:[%s521] sm:$0x1]
        %s553 = smul.u32 %s30, 2
        %s554 = sld [smem:[#allocation7 + %s553]]
        %vm555 = vcmask 130048
        %v557 = vsel %vm555, %v543, 0
        %v560 = vsel %vm555, %v544, 0
        %562 = vmatprep.subr.mxu0 0.0
        %563 = vmatpush1.msra.mxu0 0.0
        %564 = vmatprep.subr.mxu0 0.0
        %565 = vmatpush1.msra.mxu0 0.0
        %566 = vmatprep.subr.mxu0 0.0
        %567 = vmatpush1.msra.mxu0 0.0
        %568 = vmatprep.subr.mxu0 0.0
        %569 = vmatpush1.msra.mxu0 0.0
        %570 = vmatprep.subr.mxu0 0.0
        %571 = vmatpush1.msra.mxu0 0.0
        %572 = vmatprep.subr.mxu0 0.0
        %573 = vmatpush1.msra.mxu0 0.0
        %574 = vmatprep.subr.mxu0 0.0
        %575 = vmatpush1.msra.mxu0 0.0
        %576 = vmatprep.subr.mxu0 0.0
        %577 = vmatpush1.msra.mxu0 0.0
        %578 = vmatprep.subr.mxu0 0.0
        %579 = vmatpush1.msra.mxu0 0.0
        %580 = vmatprep.subr.mxu0 0.0
        %581 = vmatpush1.msra.mxu0 0.0
        %582 = vmatprep.subr.mxu0 0.0
        %583 = vmatpush1.msra.mxu0 0.0
        %584 = vmatprep.subr.mxu0 0.0
        %585 = vmatpush1.msra.mxu0 0.0
        %586 = vmatprep.subr.mxu0 0.0
        %587 = vmatpush1.msra.mxu0 0.0
        %588 = vmatprep.subr.mxu0 0.0
        %589 = vmatpush1.msra.mxu0 0.0
        %590 = vmatprep.subr.mxu0 0.0
        %591 = vmatpush1.msra.mxu0 %v548
        %592 = vmatprep.subr.mxu0 0.0
        %593 = vmatpush1.msra.mxu0 %v547
        %594 = vmatprep.subr.mxu0 0.0
        %595 = vmatpush2.msra.mxu0 0.0
        %596 = vmatprep.subr.mxu0 0.0
        %597 = vmatpush2.msra.mxu0 0.0
        %598 = vmatprep.subr.mxu0 0.0
        %599 = vmatpush2.msra.mxu0 0.0
        %600 = vmatprep.subr.mxu0 0.0
        %601 = vmatpush2.msra.mxu0 0.0
        %602 = vmatprep.subr.mxu0 0.0
        %603 = vmatpush2.msra.mxu0 0.0
        %604 = vmatprep.subr.mxu0 0.0
        %605 = vmatpush2.msra.mxu0 0.0
        %606 = vmatprep.subr.mxu0 0.0
        %607 = vmatpush2.msra.mxu0 0.0
        %608 = vmatprep.subr.mxu0 0.0
        %609 = vmatpush2.msra.mxu0 0.0
        %610 = vmatprep.subr.mxu0 0.0
        %611 = vmatpush2.msra.mxu0 0.0
        %612 = vmatprep.subr.mxu0 0.0
        %613 = vmatpush2.msra.mxu0 0.0
        %614 = vmatprep.subr.mxu0 0.0
        %615 = vmatpush2.msra.mxu0 0.0
        %616 = vmatprep.subr.mxu0 0.0
        %617 = vmatpush2.msra.mxu0 0.0
        %618 = vmatprep.subr.mxu0 0.0
        %619 = vmatpush2.msra.mxu0 0.0
        %620 = vmatprep.subr.mxu0 0.0
        %621 = vmatpush2.msra.mxu0 0.0
        %622 = vmatprep.subr.mxu0 0.0
        %623 = vmatpush2.msra.mxu0 0.0
        %624 = vmatprep.subr.mxu0 0.0
        %625 = vmatpush2.msra.mxu0 0.0
        %626 = vmatprep.mubr.f32.mxu0 0.0
        %627 = vmatmul.mubr.f32.gmra.mxu0 %v557
        %v628 = vpop.f32.mrf.mxu0
        %v629 = vadd.f32 0.0, %v628
        %v630 = vpop.f32.mrf.mxu0
        %631 = vmatprep.mubr.f32.mxu0 0.0
        %632 = vmatmul.mubr.f32.gmra.mxu0 %v560
        %v633 = vpop.f32.mrf.mxu0
        %v634 = vadd.f32 0.0, %v633
        %v635 = vpop.f32.mrf.mxu0
        %636 = vdwg.mxu0
        %v638 = vsel %vm555, %v545, 0
        %v641 = vsel %vm555, %v546, 0
        %643 = vmatprep.subr.mxu0 0.0
        %644 = vmatpush1.msra.mxu0 0.0
        %645 = vmatprep.subr.mxu0 0.0
        %646 = vmatpush1.msra.mxu0 0.0
        %647 = vmatprep.subr.mxu0 0.0
        %648 = vmatpush1.msra.mxu0 0.0
        %649 = vmatprep.subr.mxu0 0.0
        %650 = vmatpush1.msra.mxu0 0.0
        %651 = vmatprep.subr.mxu0 0.0
        %652 = vmatpush1.msra.mxu0 0.0
        %653 = vmatprep.subr.mxu0 0.0
        %654 = vmatpush1.msra.mxu0 0.0
        %655 = vmatprep.subr.mxu0 0.0
        %656 = vmatpush1.msra.mxu0 0.0
        %657 = vmatprep.subr.mxu0 0.0
        %658 = vmatpush1.msra.mxu0 0.0
        %659 = vmatprep.subr.mxu0 0.0
        %660 = vmatpush1.msra.mxu0 0.0
        %661 = vmatprep.subr.mxu0 0.0
        %662 = vmatpush1.msra.mxu0 0.0
        %663 = vmatprep.subr.mxu0 0.0
        %664 = vmatpush1.msra.mxu0 0.0
        %665 = vmatprep.subr.mxu0 0.0
        %666 = vmatpush1.msra.mxu0 0.0
        %667 = vmatprep.subr.mxu0 0.0
        %668 = vmatpush1.msra.mxu0 0.0
        %669 = vmatprep.subr.mxu0 0.0
        %670 = vmatpush1.msra.mxu0 0.0
        %671 = vmatprep.subr.mxu0 0.0
        %672 = vmatpush1.msra.mxu0 %v550
        %673 = vmatprep.subr.mxu0 0.0
        %674 = vmatpush1.msra.mxu0 %v549
        %675 = vmatprep.subr.mxu0 0.0
        %676 = vmatpush2.msra.mxu0 0.0
        %677 = vmatprep.subr.mxu0 0.0
        %678 = vmatpush2.msra.mxu0 0.0
        %679 = vmatprep.subr.mxu0 0.0
        %680 = vmatpush2.msra.mxu0 0.0
        %681 = vmatprep.subr.mxu0 0.0
        %682 = vmatpush2.msra.mxu0 0.0
        %683 = vmatprep.subr.mxu0 0.0
        %684 = vmatpush2.msra.mxu0 0.0
        %685 = vmatprep.subr.mxu0 0.0
        %686 = vmatpush2.msra.mxu0 0.0
        %687 = vmatprep.subr.mxu0 0.0
        %688 = vmatpush2.msra.mxu0 0.0
        %689 = vmatprep.subr.mxu0 0.0
        %690 = vmatpush2.msra.mxu0 0.0
        %691 = vmatprep.subr.mxu0 0.0
        %692 = vmatpush2.msra.mxu0 0.0
        %693 = vmatprep.subr.mxu0 0.0
        %694 = vmatpush2.msra.mxu0 0.0
        %695 = vmatprep.subr.mxu0 0.0
        %696 = vmatpush2.msra.mxu0 0.0
        %697 = vmatprep.subr.mxu0 0.0
        %698 = vmatpush2.msra.mxu0 0.0
        %699 = vmatprep.subr.mxu0 0.0
        %700 = vmatpush2.msra.mxu0 0.0
        %701 = vmatprep.subr.mxu0 0.0
        %702 = vmatpush2.msra.mxu0 0.0
        %703 = vmatprep.subr.mxu0 0.0
        %704 = vmatpush2.msra.mxu0 0.0
        %705 = vmatprep.subr.mxu0 0.0
        %706 = vmatpush2.msra.mxu0 0.0
        %707 = vmatprep.mubr.f32.mxu0 0.0
        %708 = vmatmul.mubr.f32.gmra.mxu0 %v638
        %v709 = vpop.f32.mrf.mxu0
        %v710 = vadd.f32 0.0, %v709
        %v711 = vpop.f32.mrf.mxu0
        %712 = vmatprep.mubr.f32.mxu0 0.0
        %713 = vmatmul.mubr.f32.gmra.mxu0 %v641
        %v714 = vpop.f32.mrf.mxu0
        %v715 = vadd.f32 0.0, %v714
        %v716 = vpop.f32.mrf.mxu0
        %717 = vdwg.mxu0
        %v718 = vlaneseq
        %v719 = vshrl.u32 %v718, 7
        %v720 = vsub.s32 0, %v719
        %v721 = vrot.slane %v552, %v720
        %vm722 = vcmask 64512
        %v724 = vsel %vm722, %v629, 0
        %v727 = vsel %vm722, %v634, 0
        %v730 = vsel %vm722, %v710, 0
        %v733 = vsel %vm722, %v715, 0
        %735 = vmatprep.subr.mxu0 0.0
        %736 = vmatpush1.msra.mxu0 0.0
        %737 = vmatprep.subr.mxu0 0.0
        %738 = vmatpush1.msra.mxu0 0.0
        %739 = vmatprep.subr.mxu0 0.0
        %740 = vmatpush1.msra.mxu0 0.0
        %741 = vmatprep.subr.mxu0 0.0
        %742 = vmatpush1.msra.mxu0 0.0
        %743 = vmatprep.subr.mxu0 0.0
        %744 = vmatpush1.msra.mxu0 0.0
        %745 = vmatprep.subr.mxu0 0.0
        %746 = vmatpush1.msra.mxu0 0.0
        %747 = vmatprep.subr.mxu0 0.0
        %748 = vmatpush1.msra.mxu0 0.0
        %749 = vmatprep.subr.mxu0 0.0
        %750 = vmatpush1.msra.mxu0 0.0
        %751 = vmatprep.subr.mxu0 0.0
        %752 = vmatpush1.msra.mxu0 0.0
        %753 = vmatprep.subr.mxu0 0.0
        %754 = vmatpush1.msra.mxu0 0.0
        %755 = vmatprep.subr.mxu0 0.0
        %756 = vmatpush1.msra.mxu0 0.0
        %757 = vmatprep.subr.mxu0 0.0
        %758 = vmatpush1.msra.mxu0 0.0
        %759 = vmatprep.subr.mxu0 0.0
        %760 = vmatpush1.msra.mxu0 0.0
        %761 = vmatprep.subr.mxu0 0.0
        %762 = vmatpush1.msra.mxu0 0.0
        %763 = vmatprep.subr.mxu0 0.0
        %764 = vmatpush1.msra.mxu0 0.0
        %765 = vmatprep.subr.mxu0 0.0
        %766 = vmatpush1.msra.mxu0 %v551
        %767 = vmatprep.subr.mxu0 0.0
        %768 = vmatpush2.msra.mxu0 0.0
        %769 = vmatprep.subr.mxu0 0.0
        %770 = vmatpush2.msra.mxu0 0.0
        %771 = vmatprep.subr.mxu0 0.0
        %772 = vmatpush2.msra.mxu0 0.0
        %773 = vmatprep.subr.mxu0 0.0
        %774 = vmatpush2.msra.mxu0 0.0
        %775 = vmatprep.subr.mxu0 0.0
        %776 = vmatpush2.msra.mxu0 0.0
        %777 = vmatprep.subr.mxu0 0.0
        %778 = vmatpush2.msra.mxu0 0.0
        %779 = vmatprep.subr.mxu0 0.0
        %780 = vmatpush2.msra.mxu0 0.0
        %781 = vmatprep.subr.mxu0 0.0
        %782 = vmatpush2.msra.mxu0 0.0
        %783 = vmatprep.subr.mxu0 0.0
        %784 = vmatpush2.msra.mxu0 0.0
        %785 = vmatprep.subr.mxu0 0.0
        %786 = vmatpush2.msra.mxu0 0.0
        %787 = vmatprep.subr.mxu0 0.0
        %788 = vmatpush2.msra.mxu0 0.0
        %789 = vmatprep.subr.mxu0 0.0
        %790 = vmatpush2.msra.mxu0 0.0
        %791 = vmatprep.subr.mxu0 0.0
        %792 = vmatpush2.msra.mxu0 0.0
        %793 = vmatprep.subr.mxu0 0.0
        %794 = vmatpush2.msra.mxu0 0.0
        %795 = vmatprep.subr.mxu0 0.0
        %796 = vmatpush2.msra.mxu0 0.0
        %797 = vmatprep.subr.mxu0 0.0
        %798 = vmatpush2.msra.mxu0 0.0
        %799 = vmatprep.mubr.f32.mxu0 0.0
        %800 = vmatmul.mubr.f32.gmra.mxu0 %v724
        %v801 = vpop.f32.mrf.mxu0
        %v802 = vadd.f32 %v721, %v801
        %v803 = vpop.f32.mrf.mxu0
        %804 = vmatprep.mubr.f32.mxu0 0.0
        %805 = vmatmul.mubr.f32.gmra.mxu0 %v727
        %v806 = vpop.f32.mrf.mxu0
        %v807 = vadd.f32 %v721, %v806
        %v808 = vpop.f32.mrf.mxu0
        %809 = vmatprep.mubr.f32.mxu0 0.0
        %810 = vmatmul.mubr.f32.gmra.mxu0 %v730
        %v811 = vpop.f32.mrf.mxu0
        %v812 = vadd.f32 %v721, %v811
        %v813 = vpop.f32.mrf.mxu0
        %814 = vmatprep.mubr.f32.mxu0 0.0
        %815 = vmatmul.mubr.f32.gmra.mxu0 %v733
        %v816 = vpop.f32.mrf.mxu0
        %v817 = vadd.f32 %v721, %v816
        %v818 = vpop.f32.mrf.mxu0
        %819 = vdwg.mxu0
        %vm820 = vcmp.gt.f32.partialorder %v802, 0.0
        %vm821 = vcmp.gt.f32.partialorder %v807, 0.0
        %vm822 = vcmp.gt.f32.partialorder %v812, 0.0
        %vm823 = vcmp.gt.f32.partialorder %v817, 0.0
        %v824 = vstv %s554
        %v825 = vmul.f32 %v824, %v802
        %v826 = vmul.f32 %v824, %v807
        %v827 = vmul.f32 %v824, %v812
        %v828 = vmul.f32 %v824, %v817
        %v829 = vsel %vm820, %v802, %v825
        %v830 = vsel %vm821, %v807, %v826
        %v831 = vsel %vm822, %v812, %v827
        %v832 = vsel %vm823, %v817, %v828
        %vm833 = vcmask 261120
        %v834 = vsel %vm833, %v829, 0.0
        %v835 = vsel %vm833, %v830, 0.0
        %v836 = vadd.f32 %v834, %v835
        %v837 = vrot.slane %v836, 4
        %v838 = vadd.f32 %v836, %v837
        %v839 = vrot.slane %v838, 2
        %v840 = vadd.f32 %v838, %v839
        %v841 = vrot.slane %v840, 1
        %v842 = vadd.f32 %v840, %v841
        %v843 = vsel %vm833, %v831, 0.0
        %v844 = vsel %vm833, %v832, 0.0
        %v845 = vadd.f32 %v843, %v844
        %v846 = vrot.slane %v845, 4
        %v847 = vadd.f32 %v845, %v846
        %v848 = vrot.slane %v847, 2
        %v849 = vadd.f32 %v847, %v848
        %v850 = vrot.slane %v849, 1
        %v851 = vadd.f32 %v849, %v850
        %vm852 = vcmask 253952
        %853 = vst.msk [vmem:[%s541] sm:$0x1] %vm852, %v842
        %854 = vst.msk [vmem:[%s541 + $0x2] sm:$0x1] %vm852, %v851
        %v855 = vld [vmem:[%s406] sm:$0xff]
        %v856 = vld [vmem:[%s406 + $0x8] sm:$0xff]
        %v857 = vld [vmem:[%s406 + $0x10] sm:$0xff]
        %v858 = vld [vmem:[%s406 + $0x18] sm:$0xff]
        %v859 = vld [vmem:[%s521 + $0x1] sm:$0x1]
        %s860 = sadd.s32 %s553, 1
        %s861 = sld [smem:[#allocation7 + %s860]]
        %v863 = vsel %vm833, %v829, 0
        %v866 = vsel %vm833, %v830, 0
        %v869 = vsel %vm833, %v831, 0
        %v872 = vsel %vm833, %v832, 0
        %874 = vmatprep.subr.mxu0 0.0
        %875 = vmatpush1.msra.mxu0 0.0
        %876 = vmatprep.subr.mxu0 0.0
        %877 = vmatpush1.msra.mxu0 0.0
        %878 = vmatprep.subr.mxu0 0.0
        %879 = vmatpush1.msra.mxu0 0.0
        %880 = vmatprep.subr.mxu0 0.0
        %881 = vmatpush1.msra.mxu0 0.0
        %882 = vmatprep.subr.mxu0 0.0
        %883 = vmatpush1.msra.mxu0 0.0
        %884 = vmatprep.subr.mxu0 0.0
        %885 = vmatpush1.msra.mxu0 0.0
        %886 = vmatprep.subr.mxu0 0.0
        %887 = vmatpush1.msra.mxu0 0.0
        %888 = vmatprep.subr.mxu0 0.0
        %889 = vmatpush1.msra.mxu0 0.0
        %890 = vmatprep.subr.mxu0 0.0
        %891 = vmatpush1.msra.mxu0 0.0
        %892 = vmatprep.subr.mxu0 0.0
        %893 = vmatpush1.msra.mxu0 0.0
        %894 = vmatprep.subr.mxu0 0.0
        %895 = vmatpush1.msra.mxu0 0.0
        %896 = vmatprep.subr.mxu0 0.0
        %897 = vmatpush1.msra.mxu0 0.0
        %898 = vmatprep.subr.mxu0 0.0
        %899 = vmatpush1.msra.mxu0 %v858
        %900 = vmatprep.subr.mxu0 0.0
        %901 = vmatpush1.msra.mxu0 %v857
        %902 = vmatprep.subr.mxu0 0.0
        %903 = vmatpush1.msra.mxu0 %v856
        %904 = vmatprep.subr.mxu0 0.0
        %905 = vmatpush1.msra.mxu0 %v855
        %906 = vmatprep.subr.mxu0 0.0
        %907 = vmatpush2.msra.mxu0 0.0
        %908 = vmatprep.subr.mxu0 0.0
        %909 = vmatpush2.msra.mxu0 0.0
        %910 = vmatprep.subr.mxu0 0.0
        %911 = vmatpush2.msra.mxu0 0.0
        %912 = vmatprep.subr.mxu0 0.0
        %913 = vmatpush2.msra.mxu0 0.0
        %914 = vmatprep.subr.mxu0 0.0
        %915 = vmatpush2.msra.mxu0 0.0
        %916 = vmatprep.subr.mxu0 0.0
        %917 = vmatpush2.msra.mxu0 0.0
        %918 = vmatprep.subr.mxu0 0.0
        %919 = vmatpush2.msra.mxu0 0.0
        %920 = vmatprep.subr.mxu0 0.0
        %921 = vmatpush2.msra.mxu0 0.0
        %922 = vmatprep.subr.mxu0 0.0
        %923 = vmatpush2.msra.mxu0 0.0
        %924 = vmatprep.subr.mxu0 0.0
        %925 = vmatpush2.msra.mxu0 0.0
        %926 = vmatprep.subr.mxu0 0.0
        %927 = vmatpush2.msra.mxu0 0.0
        %928 = vmatprep.subr.mxu0 0.0
        %929 = vmatpush2.msra.mxu0 0.0
        %930 = vmatprep.subr.mxu0 0.0
        %931 = vmatpush2.msra.mxu0 0.0
        %932 = vmatprep.subr.mxu0 0.0
        %933 = vmatpush2.msra.mxu0 0.0
        %934 = vmatprep.subr.mxu0 0.0
        %935 = vmatpush2.msra.mxu0 0.0
        %936 = vmatprep.subr.mxu0 0.0
        %937 = vmatpush2.msra.mxu0 0.0
        %938 = vmatprep.mubr.f32.mxu0 0.0
        %939 = vmatmul.mubr.f32.gmra.mxu0 %v863
        %v940 = vpop.f32.mrf.mxu0
        %v941 = vadd.f32 0.0, %v940
        %v942 = vpop.f32.mrf.mxu0
        %943 = vmatprep.mubr.f32.mxu0 0.0
        %944 = vmatmul.mubr.f32.gmra.mxu0 %v866
        %v945 = vpop.f32.mrf.mxu0
        %v946 = vadd.f32 0.0, %v945
        %v947 = vpop.f32.mrf.mxu0
        %948 = vmatprep.mubr.f32.mxu0 0.0
        %949 = vmatmul.mubr.f32.gmra.mxu0 %v869
        %v950 = vpop.f32.mrf.mxu0
        %v951 = vadd.f32 0.0, %v950
        %v952 = vpop.f32.mrf.mxu0
        %953 = vmatprep.mubr.f32.mxu0 0.0
        %954 = vmatmul.mubr.f32.gmra.mxu0 %v872
        %v955 = vpop.f32.mrf.mxu0
        %v956 = vadd.f32 0.0, %v955
        %v957 = vpop.f32.mrf.mxu0
        %958 = vdwg.mxu0
        %959 = vmatprep.subr.mxu0 0.0
        %960 = vmatpush1.msra.mxu0 0.0
        %961 = vmatprep.subr.mxu0 0.0
        %962 = vmatpush1.msra.mxu0 0.0
        %963 = vmatprep.subr.mxu0 0.0
        %964 = vmatpush1.msra.mxu0 0.0
        %965 = vmatprep.subr.mxu0 0.0
        %966 = vmatpush1.msra.mxu0 0.0
        %967 = vmatprep.subr.mxu0 0.0
        %968 = vmatpush1.msra.mxu0 0.0
        %969 = vmatprep.subr.mxu0 0.0
        %970 = vmatpush1.msra.mxu0 0.0
        %971 = vmatprep.subr.mxu0 0.0
        %972 = vmatpush1.msra.mxu0 0.0
        %973 = vmatprep.subr.mxu0 0.0
        %974 = vmatpush1.msra.mxu0 0.0
        %975 = vmatprep.subr.mxu0 0.0
        %976 = vmatpush1.msra.mxu0 0.0
        %977 = vmatprep.subr.mxu0 0.0
        %978 = vmatpush1.msra.mxu0 0.0
        %979 = vmatprep.subr.mxu0 0.0
        %980 = vmatpush1.msra.mxu0 0.0
        %981 = vmatprep.subr.mxu0 0.0
        %982 = vmatpush1.msra.mxu0 0.0
        %983 = vmatprep.subr.mxu0 0.0
        %984 = vmatpush1.msra.mxu0 0.0
        %985 = vmatprep.subr.mxu0 0.0
        %986 = vmatpush1.msra.mxu0 0.0
        %987 = vmatprep.subr.mxu0 0.0
        %988 = vmatpush1.msra.mxu0 %v946
        %989 = vmatprep.subr.mxu0 0.0
        %990 = vmatpush1.msra.mxu0 %v941
        %991 = vmatprep.subr.mxu0 0.0
        %992 = vmatpush2.msra.mxu0 0.0
        %993 = vmatprep.subr.mxu0 0.0
        %994 = vmatpush2.msra.mxu0 0.0
        %995 = vmatprep.subr.mxu0 0.0
        %996 = vmatpush2.msra.mxu0 0.0
        %997 = vmatprep.subr.mxu0 0.0
        %998 = vmatpush2.msra.mxu0 0.0
        %999 = vmatprep.subr.mxu0 0.0
        %1000 = vmatpush2.msra.mxu0 0.0
        %1001 = vmatprep.subr.mxu0 0.0
        %1002 = vmatpush2.msra.mxu0 0.0
        %1003 = vmatprep.subr.mxu0 0.0
        %1004 = vmatpush2.msra.mxu0 0.0
        %1005 = vmatprep.subr.mxu0 0.0
        %1006 = vmatpush2.msra.mxu0 0.0
        %1007 = vmatprep.subr.mxu0 0.0
        %1008 = vmatpush2.msra.mxu0 0.0
        %1009 = vmatprep.subr.mxu0 0.0
        %1010 = vmatpush2.msra.mxu0 0.0
        %1011 = vmatprep.subr.mxu0 0.0
        %1012 = vmatpush2.msra.mxu0 0.0
        %1013 = vmatprep.subr.mxu0 0.0
        %1014 = vmatpush2.msra.mxu0 0.0
        %1015 = vmatprep.subr.mxu0 0.0
        %1016 = vmatpush2.msra.mxu0 0.0
        %1017 = vmatprep.subr.mxu0 0.0
        %1018 = vmatpush2.msra.mxu0 0.0
        %1019 = vmatprep.subr.mxu0 0.0
        %1020 = vmatpush2.msra.mxu0 0.0
        %1021 = vmatprep.subr.mxu0 0.0
        %1022 = vmatpush2.msra.mxu0 0.0
        %1023 = vmatprep.mubr.f32.mxu0 0.0
        %1024 = vmatmul.mubr.f32.gmra.mxu0 %v557
        %v1025 = vpop.f32.mrf.mxu0
        %v1026 = vadd.f32 0.0, %v1025
        %v1027 = vpop.f32.mrf.mxu0
        %1028 = vmatprep.mubr.f32.mxu0 0.0
        %1029 = vmatmul.mubr.f32.gmra.mxu0 %v560
        %v1030 = vpop.f32.mrf.mxu0
        %v1031 = vadd.f32 0.0, %v1030
        %v1032 = vpop.f32.mrf.mxu0
        %1033 = vdwg.mxu0
        %1034 = vmatprep.subr.mxu0 0.0
        %1035 = vmatpush1.msra.mxu0 0.0
        %1036 = vmatprep.subr.mxu0 0.0
        %1037 = vmatpush1.msra.mxu0 0.0
        %1038 = vmatprep.subr.mxu0 0.0
        %1039 = vmatpush1.msra.mxu0 0.0
        %1040 = vmatprep.subr.mxu0 0.0
        %1041 = vmatpush1.msra.mxu0 0.0
        %1042 = vmatprep.subr.mxu0 0.0
        %1043 = vmatpush1.msra.mxu0 0.0
        %1044 = vmatprep.subr.mxu0 0.0
        %1045 = vmatpush1.msra.mxu0 0.0
        %1046 = vmatprep.subr.mxu0 0.0
        %1047 = vmatpush1.msra.mxu0 0.0
        %1048 = vmatprep.subr.mxu0 0.0
        %1049 = vmatpush1.msra.mxu0 0.0
        %1050 = vmatprep.subr.mxu0 0.0
        %1051 = vmatpush1.msra.mxu0 0.0
        %1052 = vmatprep.subr.mxu0 0.0
        %1053 = vmatpush1.msra.mxu0 0.0
        %1054 = vmatprep.subr.mxu0 0.0
        %1055 = vmatpush1.msra.mxu0 0.0
        %1056 = vmatprep.subr.mxu0 0.0
        %1057 = vmatpush1.msra.mxu0 0.0
        %1058 = vmatprep.subr.mxu0 0.0
        %1059 = vmatpush1.msra.mxu0 0.0
        %1060 = vmatprep.subr.mxu0 0.0
        %1061 = vmatpush1.msra.mxu0 0.0
        %1062 = vmatprep.subr.mxu0 0.0
        %1063 = vmatpush1.msra.mxu0 %v956
        %1064 = vmatprep.subr.mxu0 0.0
        %1065 = vmatpush1.msra.mxu0 %v951
        %1066 = vmatprep.subr.mxu0 0.0
        %1067 = vmatpush2.msra.mxu0 0.0
        %1068 = vmatprep.subr.mxu0 0.0
        %1069 = vmatpush2.msra.mxu0 0.0
        %1070 = vmatprep.subr.mxu0 0.0
        %1071 = vmatpush2.msra.mxu0 0.0
        %1072 = vmatprep.subr.mxu0 0.0
        %1073 = vmatpush2.msra.mxu0 0.0
        %1074 = vmatprep.subr.mxu0 0.0
        %1075 = vmatpush2.msra.mxu0 0.0
        %1076 = vmatprep.subr.mxu0 0.0
        %1077 = vmatpush2.msra.mxu0 0.0
        %1078 = vmatprep.subr.mxu0 0.0
        %1079 = vmatpush2.msra.mxu0 0.0
        %1080 = vmatprep.subr.mxu0 0.0
        %1081 = vmatpush2.msra.mxu0 0.0
        %1082 = vmatprep.subr.mxu0 0.0
        %1083 = vmatpush2.msra.mxu0 0.0
        %1084 = vmatprep.subr.mxu0 0.0
        %1085 = vmatpush2.msra.mxu0 0.0
        %1086 = vmatprep.subr.mxu0 0.0
        %1087 = vmatpush2.msra.mxu0 0.0
        %1088 = vmatprep.subr.mxu0 0.0
        %1089 = vmatpush2.msra.mxu0 0.0
        %1090 = vmatprep.subr.mxu0 0.0
        %1091 = vmatpush2.msra.mxu0 0.0
        %1092 = vmatprep.subr.mxu0 0.0
        %1093 = vmatpush2.msra.mxu0 0.0
        %1094 = vmatprep.subr.mxu0 0.0
        %1095 = vmatpush2.msra.mxu0 0.0
        %1096 = vmatprep.subr.mxu0 0.0
        %1097 = vmatpush2.msra.mxu0 0.0
        %1098 = vmatprep.mubr.f32.mxu0 0.0
        %1099 = vmatmul.mubr.f32.gmra.mxu0 %v638
        %v1100 = vpop.f32.mrf.mxu0
        %v1101 = vadd.f32 0.0, %v1100
        %v1102 = vpop.f32.mrf.mxu0
        %1103 = vmatprep.mubr.f32.mxu0 0.0
        %1104 = vmatmul.mubr.f32.gmra.mxu0 %v641
        %v1105 = vpop.f32.mrf.mxu0
        %v1106 = vadd.f32 0.0, %v1105
        %v1107 = vpop.f32.mrf.mxu0
        %1108 = vdwg.mxu0
        %v1109 = vlaneseq
        %v1110 = vshrl.u32 %v1109, 7
        %v1111 = vsub.s32 0, %v1110
        %v1112 = vrot.slane %v859, %v1111
        %v1113 = vadd.f32 %v1026, %v1112
        %v1114 = vadd.f32 %v1031, %v1112
        %v1115 = vadd.f32 %v1101, %v1112
        %v1116 = vadd.f32 %v1106, %v1112
        %vm1117 = vcmp.gt.f32.partialorder %v1113, 0.0
        %vm1118 = vcmp.gt.f32.partialorder %v1114, 0.0
        %vm1119 = vcmp.gt.f32.partialorder %v1115, 0.0
        %vm1120 = vcmp.gt.f32.partialorder %v1116, 0.0
        %v1121 = vstv %s861
        %v1122 = vmul.f32 %v1121, %v1113
        %v1123 = vmul.f32 %v1121, %v1114
        %v1124 = vmul.f32 %v1121, %v1115
        %v1125 = vmul.f32 %v1121, %v1116
        %v1126 = vsel %vm1117, %v1113, %v1122
        %v1127 = vsel %vm1118, %v1114, %v1123
        %v1128 = vsel %vm1119, %v1115, %v1124
        %v1129 = vsel %vm1120, %v1116, %v1125
        %v1130 = vsel %vm833, %v1126, 0.0
        %v1131 = vsel %vm833, %v1127, 0.0
        %v1132 = vadd.f32 %v1130, %v1131
        %v1133 = vrot.slane %v1132, 4
        %v1134 = vadd.f32 %v1132, %v1133
        %v1135 = vrot.slane %v1134, 2
        %v1136 = vadd.f32 %v1134, %v1135
        %v1137 = vrot.slane %v1136, 1
        %v1138 = vadd.f32 %v1136, %v1137
        %v1139 = vsel %vm833, %v1128, 0.0
        %v1140 = vsel %vm833, %v1129, 0.0
        %v1141 = vadd.f32 %v1139, %v1140
        %v1142 = vrot.slane %v1141, 4
        %v1143 = vadd.f32 %v1141, %v1142
        %v1144 = vrot.slane %v1143, 2
        %v1145 = vadd.f32 %v1143, %v1144
        %v1146 = vrot.slane %v1145, 1
        %v1147 = vadd.f32 %v1145, %v1146
        %1148 = vst.msk [vmem:[%s541 + $0x1] sm:$0x1] %vm852, %v1138
        %1149 = vst.msk [vmem:[%s541 + $0x3] sm:$0x1] %vm852, %v1147
        %s1150 = sld [smem:[#allocation7 + $0x4]]
        %s1151 = sld [smem:[#allocation7 + $0x5]]
        %s1152 = sld [smem:[#allocation7 + $0x6]]
        %v1153 = vld [vmem:[#allocation5] sm:$0xff]
        %v1154 = vld [vmem:[#allocation5 + $0x8] sm:$0xff]
        %v1155 = vld [vmem:[#allocation5 + $0x10] sm:$0xff]
        %v1156 = vld [vmem:[#allocation5 + $0x18] sm:$0xff]
        %s1157 = scalar_lea.vmem [#allocation5], 32
        %v1158 = vld [vmem:[%s1157] sm:$0xff]
        %v1159 = vld [vmem:[%s1157 + $0x8] sm:$0xff]
        %v1160 = vld [vmem:[%s1157 + $0x10] sm:$0xff]
        %v1161 = vld [vmem:[%s1157 + $0x18] sm:$0xff]
        %s1162 = scalar_lea.vmem [#allocation5], 64
        %v1163 = vld [vmem:[%s1162] sm:$0xff]
        %v1164 = vld [vmem:[%s1162 + $0x8] sm:$0xff]
        %v1165 = vld [vmem:[%s1162 + $0x10] sm:$0xff]
        %v1166 = vld [vmem:[%s1162 + $0x18] sm:$0xff]
        %s1167 = scalar_lea.vmem [#allocation5], 96
        %v1168 = vld [vmem:[%s1167] sm:$0xff]
        %v1169 = vld [vmem:[%s1167 + $0x8] sm:$0xff]
        %v1170 = vld [vmem:[%s1167 + $0x10] sm:$0xff]
        %v1171 = vld [vmem:[%s1167 + $0x18] sm:$0xff]
        %v1172 = vld [vmem:[%s6] sm:$0x1]
        %v1173 = vld [vmem:[%s6 + $0x1] sm:$0x1]
        %v1174 = vld [vmem:[%s6 + $0x2] sm:$0x1]
        %v1175 = vld [vmem:[%s6 + $0x3] sm:$0x1]
        %v1176 = vlaneseq
        %v1177 = vshrl.u32 %v1176, 7
        %v1178 = vsub.s32 0, %v1177
        %v1179 = vrot.slane %v1172, %v1178
        %v1181 = vsel %vm833, %v1126, 0
        %v1184 = vsel %vm833, %v1127, 0
        %v1187 = vsel %vm833, %v1128, 0
        %v1190 = vsel %vm833, %v1129, 0
        %1192 = vmatprep.subr.mxu0 0.0
        %1193 = vmatpush1.msra.mxu0 0.0
        %1194 = vmatprep.subr.mxu0 0.0
        %1195 = vmatpush1.msra.mxu0 0.0
        %1196 = vmatprep.subr.mxu0 0.0
        %1197 = vmatpush1.msra.mxu0 0.0
        %1198 = vmatprep.subr.mxu0 0.0
        %1199 = vmatpush1.msra.mxu0 0.0
        %1200 = vmatprep.subr.mxu0 0.0
        %1201 = vmatpush1.msra.mxu0 0.0
        %1202 = vmatprep.subr.mxu0 0.0
        %1203 = vmatpush1.msra.mxu0 0.0
        %1204 = vmatprep.subr.mxu0 0.0
        %1205 = vmatpush1.msra.mxu0 0.0
        %1206 = vmatprep.subr.mxu0 0.0
        %1207 = vmatpush1.msra.mxu0 0.0
        %1208 = vmatprep.subr.mxu0 0.0
        %1209 = vmatpush1.msra.mxu0 0.0
        %1210 = vmatprep.subr.mxu0 0.0
        %1211 = vmatpush1.msra.mxu0 0.0
        %1212 = vmatprep.subr.mxu0 0.0
        %1213 = vmatpush1.msra.mxu0 0.0
        %1214 = vmatprep.subr.mxu0 0.0
        %1215 = vmatpush1.msra.mxu0 0.0
        %1216 = vmatprep.subr.mxu0 0.0
        %1217 = vmatpush1.msra.mxu0 %v1156
        %1218 = vmatprep.subr.mxu0 0.0
        %1219 = vmatpush1.msra.mxu0 %v1155
        %1220 = vmatprep.subr.mxu0 0.0
        %1221 = vmatpush1.msra.mxu0 %v1154
        %1222 = vmatprep.subr.mxu0 0.0
        %1223 = vmatpush1.msra.mxu0 %v1153
        %1224 = vmatprep.subr.mxu0 0.0
        %1225 = vmatpush2.msra.mxu0 0.0
        %1226 = vmatprep.subr.mxu0 0.0
        %1227 = vmatpush2.msra.mxu0 0.0
        %1228 = vmatprep.subr.mxu0 0.0
        %1229 = vmatpush2.msra.mxu0 0.0
        %1230 = vmatprep.subr.mxu0 0.0
        %1231 = vmatpush2.msra.mxu0 0.0
        %1232 = vmatprep.subr.mxu0 0.0
        %1233 = vmatpush2.msra.mxu0 0.0
        %1234 = vmatprep.subr.mxu0 0.0
        %1235 = vmatpush2.msra.mxu0 0.0
        %1236 = vmatprep.subr.mxu0 0.0
        %1237 = vmatpush2.msra.mxu0 0.0
        %1238 = vmatprep.subr.mxu0 0.0
        %1239 = vmatpush2.msra.mxu0 0.0
        %1240 = vmatprep.subr.mxu0 0.0
        %1241 = vmatpush2.msra.mxu0 0.0
        %1242 = vmatprep.subr.mxu0 0.0
        %1243 = vmatpush2.msra.mxu0 0.0
        %1244 = vmatprep.subr.mxu0 0.0
        %1245 = vmatpush2.msra.mxu0 0.0
        %1246 = vmatprep.subr.mxu0 0.0
        %1247 = vmatpush2.msra.mxu0 0.0
        %1248 = vmatprep.subr.mxu0 0.0
        %1249 = vmatpush2.msra.mxu0 0.0
        %1250 = vmatprep.subr.mxu0 0.0
        %1251 = vmatpush2.msra.mxu0 0.0
        %1252 = vmatprep.subr.mxu0 0.0
        %1253 = vmatpush2.msra.mxu0 0.0
        %1254 = vmatprep.subr.mxu0 0.0
        %1255 = vmatpush2.msra.mxu0 0.0
        %1256 = vmatprep.mubr.f32.mxu0 0.0
        %1257 = vmatmul.mubr.f32.gmra.mxu0 %v1181
        %v1258 = vpop.f32.mrf.mxu0
        %v1259 = vadd.f32 %v1179, %v1258
        %v1260 = vpop.f32.mrf.mxu0
        %1261 = vmatprep.mubr.f32.mxu0 0.0
        %1262 = vmatmul.mubr.f32.gmra.mxu0 %v1184
        %v1263 = vpop.f32.mrf.mxu0
        %v1264 = vadd.f32 %v1179, %v1263
        %v1265 = vpop.f32.mrf.mxu0
        %1266 = vmatprep.mubr.f32.mxu0 0.0
        %1267 = vmatmul.mubr.f32.gmra.mxu0 %v1187
        %v1268 = vpop.f32.mrf.mxu0
        %v1269 = vadd.f32 %v1179, %v1268
        %v1270 = vpop.f32.mrf.mxu0
        %1271 = vmatprep.mubr.f32.mxu0 0.0
        %1272 = vmatmul.mubr.f32.gmra.mxu0 %v1190
        %v1273 = vpop.f32.mrf.mxu0
        %v1274 = vadd.f32 %v1179, %v1273
        %v1275 = vpop.f32.mrf.mxu0
        %1276 = vdwg.mxu0
        %vm1277 = vcmp.gt.f32.partialorder %v1259, 0.0
        %vm1278 = vcmp.gt.f32.partialorder %v1264, 0.0
        %vm1279 = vcmp.gt.f32.partialorder %v1269, 0.0
        %vm1280 = vcmp.gt.f32.partialorder %v1274, 0.0
        %v1281 = vstv %s1150
        %v1282 = vmul.f32 %v1281, %v1259
        %v1283 = vmul.f32 %v1281, %v1264
        %v1284 = vmul.f32 %v1281, %v1269
        %v1285 = vmul.f32 %v1281, %v1274
        %v1286 = vsel %vm1277, %v1259, %v1282
        %v1287 = vsel %vm1278, %v1264, %v1283
        %v1288 = vsel %vm1279, %v1269, %v1284
        %v1289 = vsel %vm1280, %v1274, %v1285
        %v1290 = vlaneseq
        %v1291 = vshrl.u32 %v1290, 7
        %v1292 = vsub.s32 0, %v1291
        %v1293 = vrot.slane %v1173, %v1292
        %v1295 = vsel %vm833, %v1286, 0
        %v1298 = vsel %vm833, %v1287, 0
        %v1301 = vsel %vm833, %v1288, 0
        %v1304 = vsel %vm833, %v1289, 0
        %1306 = vmatprep.subr.mxu0 0.0
        %1307 = vmatpush1.msra.mxu0 0.0
        %1308 = vmatprep.subr.mxu0 0.0
        %1309 = vmatpush1.msra.mxu0 0.0
        %1310 = vmatprep.subr.mxu0 0.0
        %1311 = vmatpush1.msra.mxu0 0.0
        %1312 = vmatprep.subr.mxu0 0.0
        %1313 = vmatpush1.msra.mxu0 0.0
        %1314 = vmatprep.subr.mxu0 0.0
        %1315 = vmatpush1.msra.mxu0 0.0
        %1316 = vmatprep.subr.mxu0 0.0
        %1317 = vmatpush1.msra.mxu0 0.0
        %1318 = vmatprep.subr.mxu0 0.0
        %1319 = vmatpush1.msra.mxu0 0.0
        %1320 = vmatprep.subr.mxu0 0.0
        %1321 = vmatpush1.msra.mxu0 0.0
        %1322 = vmatprep.subr.mxu0 0.0
        %1323 = vmatpush1.msra.mxu0 0.0
        %1324 = vmatprep.subr.mxu0 0.0
        %1325 = vmatpush1.msra.mxu0 0.0
        %1326 = vmatprep.subr.mxu0 0.0
        %1327 = vmatpush1.msra.mxu0 0.0
        %1328 = vmatprep.subr.mxu0 0.0
        %1329 = vmatpush1.msra.mxu0 0.0
        %1330 = vmatprep.subr.mxu0 0.0
        %1331 = vmatpush1.msra.mxu0 %v1161
        %1332 = vmatprep.subr.mxu0 0.0
        %1333 = vmatpush1.msra.mxu0 %v1160
        %1334 = vmatprep.subr.mxu0 0.0
        %1335 = vmatpush1.msra.mxu0 %v1159
        %1336 = vmatprep.subr.mxu0 0.0
        %1337 = vmatpush1.msra.mxu0 %v1158
        %1338 = vmatprep.subr.mxu0 0.0
        %1339 = vmatpush2.msra.mxu0 0.0
        %1340 = vmatprep.subr.mxu0 0.0
        %1341 = vmatpush2.msra.mxu0 0.0
        %1342 = vmatprep.subr.mxu0 0.0
        %1343 = vmatpush2.msra.mxu0 0.0
        %1344 = vmatprep.subr.mxu0 0.0
        %1345 = vmatpush2.msra.mxu0 0.0
        %1346 = vmatprep.subr.mxu0 0.0
        %1347 = vmatpush2.msra.mxu0 0.0
        %1348 = vmatprep.subr.mxu0 0.0
        %1349 = vmatpush2.msra.mxu0 0.0
        %1350 = vmatprep.subr.mxu0 0.0
        %1351 = vmatpush2.msra.mxu0 0.0
        %1352 = vmatprep.subr.mxu0 0.0
        %1353 = vmatpush2.msra.mxu0 0.0
        %1354 = vmatprep.subr.mxu0 0.0
        %1355 = vmatpush2.msra.mxu0 0.0
        %1356 = vmatprep.subr.mxu0 0.0
        %1357 = vmatpush2.msra.mxu0 0.0
        %1358 = vmatprep.subr.mxu0 0.0
        %1359 = vmatpush2.msra.mxu0 0.0
        %1360 = vmatprep.subr.mxu0 0.0
        %1361 = vmatpush2.msra.mxu0 0.0
        %1362 = vmatprep.subr.mxu0 0.0
        %1363 = vmatpush2.msra.mxu0 0.0
        %1364 = vmatprep.subr.mxu0 0.0
        %1365 = vmatpush2.msra.mxu0 0.0
        %1366 = vmatprep.subr.mxu0 0.0
        %1367 = vmatpush2.msra.mxu0 0.0
        %1368 = vmatprep.subr.mxu0 0.0
        %1369 = vmatpush2.msra.mxu0 0.0
        %1370 = vmatprep.mubr.f32.mxu0 0.0
        %1371 = vmatmul.mubr.f32.gmra.mxu0 %v1295
        %v1372 = vpop.f32.mrf.mxu0
        %v1373 = vadd.f32 %v1293, %v1372
        %v1374 = vpop.f32.mrf.mxu0
        %1375 = vmatprep.mubr.f32.mxu0 0.0
        %1376 = vmatmul.mubr.f32.gmra.mxu0 %v1298
        %v1377 = vpop.f32.mrf.mxu0
        %v1378 = vadd.f32 %v1293, %v1377
        %v1379 = vpop.f32.mrf.mxu0
        %1380 = vmatprep.mubr.f32.mxu0 0.0
        %1381 = vmatmul.mubr.f32.gmra.mxu0 %v1301
        %v1382 = vpop.f32.mrf.mxu0
        %v1383 = vadd.f32 %v1293, %v1382
        %v1384 = vpop.f32.mrf.mxu0
        %1385 = vmatprep.mubr.f32.mxu0 0.0
        %1386 = vmatmul.mubr.f32.gmra.mxu0 %v1304
        %v1387 = vpop.f32.mrf.mxu0
        %v1388 = vadd.f32 %v1293, %v1387
        %v1389 = vpop.f32.mrf.mxu0
        %1390 = vdwg.mxu0
        %vm1391 = vcmp.gt.f32.partialorder %v1373, 0.0
        %vm1392 = vcmp.gt.f32.partialorder %v1378, 0.0
        %vm1393 = vcmp.gt.f32.partialorder %v1383, 0.0
        %vm1394 = vcmp.gt.f32.partialorder %v1388, 0.0
        %v1395 = vstv %s1151
        %v1396 = vmul.f32 %v1395, %v1373
        %v1397 = vmul.f32 %v1395, %v1378
        %v1398 = vmul.f32 %v1395, %v1383
        %v1399 = vmul.f32 %v1395, %v1388
        %v1400 = vsel %vm1391, %v1373, %v1396
        %v1401 = vsel %vm1392, %v1378, %v1397
        %v1402 = vsel %vm1393, %v1383, %v1398
        %v1403 = vsel %vm1394, %v1388, %v1399
        %v1404 = vlaneseq
        %v1405 = vshrl.u32 %v1404, 7
        %v1406 = vsub.s32 0, %v1405
        %v1407 = vrot.slane %v1174, %v1406
        %v1409 = vsel %vm833, %v1400, 0
        %v1412 = vsel %vm833, %v1401, 0
        %v1415 = vsel %vm833, %v1402, 0
        %v1418 = vsel %vm833, %v1403, 0
        %1420 = vmatprep.subr.mxu0 0.0
        %1421 = vmatpush1.msra.mxu0 0.0
        %1422 = vmatprep.subr.mxu0 0.0
        %1423 = vmatpush1.msra.mxu0 0.0
        %1424 = vmatprep.subr.mxu0 0.0
        %1425 = vmatpush1.msra.mxu0 0.0
        %1426 = vmatprep.subr.mxu0 0.0
        %1427 = vmatpush1.msra.mxu0 0.0
        %1428 = vmatprep.subr.mxu0 0.0
        %1429 = vmatpush1.msra.mxu0 0.0
        %1430 = vmatprep.subr.mxu0 0.0
        %1431 = vmatpush1.msra.mxu0 0.0
        %1432 = vmatprep.subr.mxu0 0.0
        %1433 = vmatpush1.msra.mxu0 0.0
        %1434 = vmatprep.subr.mxu0 0.0
        %1435 = vmatpush1.msra.mxu0 0.0
        %1436 = vmatprep.subr.mxu0 0.0
        %1437 = vmatpush1.msra.mxu0 0.0
        %1438 = vmatprep.subr.mxu0 0.0
        %1439 = vmatpush1.msra.mxu0 0.0
        %1440 = vmatprep.subr.mxu0 0.0
        %1441 = vmatpush1.msra.mxu0 0.0
        %1442 = vmatprep.subr.mxu0 0.0
        %1443 = vmatpush1.msra.mxu0 0.0
        %1444 = vmatprep.subr.mxu0 0.0
        %1445 = vmatpush1.msra.mxu0 %v1166
        %1446 = vmatprep.subr.mxu0 0.0
        %1447 = vmatpush1.msra.mxu0 %v1165
        %1448 = vmatprep.subr.mxu0 0.0
        %1449 = vmatpush1.msra.mxu0 %v1164
        %1450 = vmatprep.subr.mxu0 0.0
        %1451 = vmatpush1.msra.mxu0 %v1163
        %1452 = vmatprep.subr.mxu0 0.0
        %1453 = vmatpush2.msra.mxu0 0.0
        %1454 = vmatprep.subr.mxu0 0.0
        %1455 = vmatpush2.msra.mxu0 0.0
        %1456 = vmatprep.subr.mxu0 0.0
        %1457 = vmatpush2.msra.mxu0 0.0
        %1458 = vmatprep.subr.mxu0 0.0
        %1459 = vmatpush2.msra.mxu0 0.0
        %1460 = vmatprep.subr.mxu0 0.0
        %1461 = vmatpush2.msra.mxu0 0.0
        %1462 = vmatprep.subr.mxu0 0.0
        %1463 = vmatpush2.msra.mxu0 0.0
        %1464 = vmatprep.subr.mxu0 0.0
        %1465 = vmatpush2.msra.mxu0 0.0
        %1466 = vmatprep.subr.mxu0 0.0
        %1467 = vmatpush2.msra.mxu0 0.0
        %1468 = vmatprep.subr.mxu0 0.0
        %1469 = vmatpush2.msra.mxu0 0.0
        %1470 = vmatprep.subr.mxu0 0.0
        %1471 = vmatpush2.msra.mxu0 0.0
        %1472 = vmatprep.subr.mxu0 0.0
        %1473 = vmatpush2.msra.mxu0 0.0
        %1474 = vmatprep.subr.mxu0 0.0
        %1475 = vmatpush2.msra.mxu0 0.0
        %1476 = vmatprep.subr.mxu0 0.0
        %1477 = vmatpush2.msra.mxu0 0.0
        %1478 = vmatprep.subr.mxu0 0.0
        %1479 = vmatpush2.msra.mxu0 0.0
        %1480 = vmatprep.subr.mxu0 0.0
        %1481 = vmatpush2.msra.mxu0 0.0
        %1482 = vmatprep.subr.mxu0 0.0
        %1483 = vmatpush2.msra.mxu0 0.0
        %1484 = vmatprep.mubr.f32.mxu0 0.0
        %1485 = vmatmul.mubr.f32.gmra.mxu0 %v1409
        %v1486 = vpop.f32.mrf.mxu0
        %v1487 = vadd.f32 %v1407, %v1486
        %v1488 = vpop.f32.mrf.mxu0
        %1489 = vmatprep.mubr.f32.mxu0 0.0
        %1490 = vmatmul.mubr.f32.gmra.mxu0 %v1412
        %v1491 = vpop.f32.mrf.mxu0
        %v1492 = vadd.f32 %v1407, %v1491
        %v1493 = vpop.f32.mrf.mxu0
        %1494 = vmatprep.mubr.f32.mxu0 0.0
        %1495 = vmatmul.mubr.f32.gmra.mxu0 %v1415
        %v1496 = vpop.f32.mrf.mxu0
        %v1497 = vadd.f32 %v1407, %v1496
        %v1498 = vpop.f32.mrf.mxu0
        %1499 = vmatprep.mubr.f32.mxu0 0.0
        %1500 = vmatmul.mubr.f32.gmra.mxu0 %v1418
        %v1501 = vpop.f32.mrf.mxu0
        %v1502 = vadd.f32 %v1407, %v1501
        %v1503 = vpop.f32.mrf.mxu0
        %1504 = vdwg.mxu0
        %vm1505 = vcmp.gt.f32.partialorder %v1487, 0.0
        %vm1506 = vcmp.gt.f32.partialorder %v1492, 0.0
        %vm1507 = vcmp.gt.f32.partialorder %v1497, 0.0
        %vm1508 = vcmp.gt.f32.partialorder %v1502, 0.0
        %v1509 = vstv %s1152
        %v1510 = vmul.f32 %v1509, %v1487
        %v1511 = vmul.f32 %v1509, %v1492
        %v1512 = vmul.f32 %v1509, %v1497
        %v1513 = vmul.f32 %v1509, %v1502
        %v1514 = vsel %vm1505, %v1487, %v1510
        %v1515 = vsel %vm1506, %v1492, %v1511
        %v1516 = vsel %vm1507, %v1497, %v1512
        %v1517 = vsel %vm1508, %v1502, %v1513
        %1518 = vmatprep.subr.mxu0 0.0
        %1519 = vmatpush1.msra.mxu0 0.0
        %1520 = vmatprep.subr.mxu0 0.0
        %1521 = vmatpush1.msra.mxu0 0.0
        %1522 = vmatprep.subr.mxu0 0.0
        %1523 = vmatpush1.msra.mxu0 0.0
        %1524 = vmatprep.subr.mxu0 0.0
        %1525 = vmatpush1.msra.mxu0 0.0
        %1526 = vmatprep.subr.mxu0 0.0
        %1527 = vmatpush1.msra.mxu0 0.0
        %1528 = vmatprep.subr.mxu0 0.0
        %1529 = vmatpush1.msra.mxu0 0.0
        %1530 = vmatprep.subr.mxu0 0.0
        %1531 = vmatpush1.msra.mxu0 0.0
        %1532 = vmatprep.subr.mxu0 0.0
        %1533 = vmatpush1.msra.mxu0 0.0
        %1534 = vmatprep.subr.mxu0 0.0
        %1535 = vmatpush1.msra.mxu0 0.0
        %1536 = vmatprep.subr.mxu0 0.0
        %1537 = vmatpush1.msra.mxu0 0.0
        %1538 = vmatprep.subr.mxu0 0.0
        %1539 = vmatpush1.msra.mxu0 0.0
        %1540 = vmatprep.subr.mxu0 0.0
        %1541 = vmatpush1.msra.mxu0 0.0
        %1542 = vmatprep.subr.mxu0 0.0
        %1543 = vmatpush1.msra.mxu0 %v1171
        %1544 = vmatprep.subr.mxu0 0.0
        %1545 = vmatpush1.msra.mxu0 %v1170
        %1546 = vmatprep.subr.mxu0 0.0
        %1547 = vmatpush1.msra.mxu0 %v1169
        %1548 = vmatprep.subr.mxu0 0.0
        %1549 = vmatpush1.msra.mxu0 %v1168
        %1550 = vmatprep.subr.mxu0 0.0
        %1551 = vmatpush2.msra.mxu0 0.0
        %1552 = vmatprep.subr.mxu0 0.0
        %1553 = vmatpush2.msra.mxu0 0.0
        %1554 = vmatprep.subr.mxu0 0.0
        %1555 = vmatpush2.msra.mxu0 0.0
        %1556 = vmatprep.subr.mxu0 0.0
        %1557 = vmatpush2.msra.mxu0 0.0
        %1558 = vmatprep.subr.mxu0 0.0
        %1559 = vmatpush2.msra.mxu0 0.0
        %1560 = vmatprep.subr.mxu0 0.0
        %1561 = vmatpush2.msra.mxu0 0.0
        %1562 = vmatprep.subr.mxu0 0.0
        %1563 = vmatpush2.msra.mxu0 0.0
        %1564 = vmatprep.subr.mxu0 0.0
        %1565 = vmatpush2.msra.mxu0 0.0
        %1566 = vmatprep.subr.mxu0 0.0
        %1567 = vmatpush2.msra.mxu0 0.0
        %1568 = vmatprep.subr.mxu0 0.0
        %1569 = vmatpush2.msra.mxu0 0.0
        %1570 = vmatprep.subr.mxu0 0.0
        %1571 = vmatpush2.msra.mxu0 0.0
        %1572 = vmatprep.subr.mxu0 0.0
        %1573 = vmatpush2.msra.mxu0 0.0
        %1574 = vmatprep.subr.mxu0 0.0
        %1575 = vmatpush2.msra.mxu0 0.0
        %1576 = vmatprep.subr.mxu0 0.0
        %1577 = vmatpush2.msra.mxu0 0.0
        %1578 = vmatprep.subr.mxu0 0.0
        %1579 = vmatpush2.msra.mxu0 0.0
        %1580 = vmatprep.subr.mxu0 0.0
        %1581 = vmatpush2.msra.mxu0 0.0
        %1582 = vmatprep.mubr.f32.mxu0 0.0
        %1583 = vmatmul.mubr.f32.gmra.mxu0 %v1181
        %v1584 = vpop.f32.mrf.mxu0
        %v1585 = vadd.f32 0.0, %v1584
        %v1586 = vpop.f32.mrf.mxu0
        %1587 = vmatprep.mubr.f32.mxu0 0.0
        %1588 = vmatmul.mubr.f32.gmra.mxu0 %v1184
        %v1589 = vpop.f32.mrf.mxu0
        %v1590 = vadd.f32 0.0, %v1589
        %v1591 = vpop.f32.mrf.mxu0
        %1592 = vmatprep.mubr.f32.mxu0 0.0
        %1593 = vmatmul.mubr.f32.gmra.mxu0 %v1187
        %v1594 = vpop.f32.mrf.mxu0
        %v1595 = vadd.f32 0.0, %v1594
        %v1596 = vpop.f32.mrf.mxu0
        %1597 = vmatprep.mubr.f32.mxu0 0.0
        %1598 = vmatmul.mubr.f32.gmra.mxu0 %v1190
        %v1599 = vpop.f32.mrf.mxu0
        %v1600 = vadd.f32 0.0, %v1599
        %v1601 = vpop.f32.mrf.mxu0
        %1602 = vdwg.mxu0
        %v1603 = vadd.f32 %v1514, %v1585
        %v1604 = vadd.f32 %v1515, %v1590
        %v1605 = vadd.f32 %v1516, %v1595
        %v1606 = vadd.f32 %v1517, %v1600
        %v1607 = vlaneseq
        %v1608 = vshrl.u32 %v1607, 7
        %v1609 = vsub.s32 0, %v1608
        %v1610 = vrot.slane %v1175, %v1609
        %v1611 = vadd.f32 %v1603, %v1610
        %v1612 = vadd.f32 %v1604, %v1610
        %v1613 = vadd.f32 %v1605, %v1610
        %v1614 = vadd.f32 %v1606, %v1610
        %1615 = vst.msk [vmem:[%s531] sm:$0xff] %vm833, %v1611
        %1616 = vst.msk [vmem:[%s531 + $0x8] sm:$0xff] %vm833, %v1612
        %1617 = vst.msk [vmem:[%s531 + $0x10] sm:$0xff] %vm833, %v1613
        %1618 = vst.msk [vmem:[%s531 + $0x18] sm:$0xff] %vm833, %v1614
        %s1619 = smul.u32 2, %s31
        %p1620 = scmp.lt.s32.totalorder %s30, 1
        %s1621 = scalar_select %p1620, %s30, 1
        %p1622 = scmp.lt.s32.totalorder %s1619, 1
        %s1623 = scalar_select %p1622, %s1619, 1
        %s1624 = smul.addr %s1623, 2
        %s1625 = smul.addr %s1621, 4
        %s1626 = sadd.s32 %s1624, %s1625
        %s1627 = smul.addr %s1626, 8
        %s1628 = scalar_lea.vmem %s8, %s1627
        %s1629 = smul.u32 2, %s31
        %p1630 = scmp.lt.s32.totalorder %s30, 1
        %s1631 = scalar_select %p1630, %s30, 1
        %p1632 = scmp.lt.s32.totalorder %s1629, 1
        %s1633 = scalar_select %p1632, %s1629, 1
        %s1634 = smul.addr %s1631, 2
        %s1635 = sadd.s32 %s1633, %s1634
        %s1636 = smul.addr %s1635, 2
        %s1637 = scalar_lea.vmem %s9, %s1636
        // Predicated region
        $region65: #{model_forward.1} parent=51 // pred_check
          %p1638 = pneg %p255
        $region66: #{model_forward.1} parent=51 // pred_check_branch
          %1640 = sbr.rel (%p1638) target = $region68
        $region67: #{model_forward.1} parent=51 // pred_region
          %s1641 = smul.u32 2, %s31
        $region68: #{model_forward.1} parent=51 // pred_fallthru
          _
        // Predicated region
        $region69: #{model_forward.1} parent=51 // pred_check
          %p1642 = pneg %p283
        $region70: #{model_forward.1} parent=51 // pred_check_branch
          %1644 = sbr.rel (%p1642) target = $region72
        $region71: #{model_forward.1} parent=51 // pred_region
          %s1645 = smul.u32 2, %s31
        $region72: #{model_forward.1} parent=51 // pred_fallthru
          _
      $region52: #{model_forward.1} parent=5 // pred_fallthru
        _
      %p1646 = scmp.le.s32.totalorder 2, %s21
      // Predicated region
      $region73: #{model_forward.1} parent=5 // pred_check
        %p1647 = pneg %p1646
      $region74: #{model_forward.1} parent=5 // pred_check_branch
        %1649 = sbr.rel (%p1647) target = $region76
      $region75: #{model_forward.1} parent=5 // pred_region
        %s1650 = ssub.s32 %s21, 2
        // Predicated region
        $region77: #{model_forward.1} parent=75 // pred_check
          %p1651 = pneg %p261
        $region78: #{model_forward.1} parent=75 // pred_check_branch
          %1653 = sbr.rel (%p1651) target = $region80
        $region79: #{model_forward.1} parent=75 // pred_region
          %s1654 = smul.u32 2, %s33
          %p1655 = scmp.lt.s32.totalorder %s32, 1
          %s1656 = scalar_select %p1655, %s32, 1
          %p1657 = scmp.lt.s32.totalorder %s1654, 1
          %s1658 = scalar_select %p1657, %s1654, 1
          %s1659 = smul.addr %s1658, 2
          %s1660 = smul.addr %s1656, 4
          %s1661 = sadd.s32 %s1659, %s1660
          %s1662 = smul.addr %s1661, 8
          %s1663 = scalar_lea.vmem %s8, %s1662
        $region80: #{model_forward.1} parent=75 // pred_fallthru
          _
        // Predicated region
        $region81: #{model_forward.1} parent=75 // pred_check
          %p1664 = pneg %p289
        $region82: #{model_forward.1} parent=75 // pred_check_branch
          %1666 = sbr.rel (%p1664) target = $region84
        $region83: #{model_forward.1} parent=75 // pred_region
          %s1667 = smul.u32 2, %s33
          %p1668 = scmp.lt.s32.totalorder %s32, 1
          %s1669 = scalar_select %p1668, %s32, 1
          %p1670 = scmp.lt.s32.totalorder %s1667, 1
          %s1671 = scalar_select %p1670, %s1667, 1
          %s1672 = smul.addr %s1669, 2
          %s1673 = sadd.s32 %s1671, %s1672
          %s1674 = smul.addr %s1673, 2
          %s1675 = scalar_lea.vmem %s9, %s1674
        $region84: #{model_forward.1} parent=75 // pred_fallthru
          _
      $region76: #{model_forward.1} parent=5 // pred_fallthru
        _
    $region6: #{model_forward.1} parent=1 // loop_footer
      %s25 = sadd.s32 1, %s21
    $region7: #{model_forward.1} parent=1 // loop_footer_branch
      %20 = sbr.rel target = $region3
    $region8: #{model_forward.1} parent=1 // loop_exit
      _
    %1676 = vsyncpa [#allocation3], 1
    %s1677 = scalar_lea.sflag [#allocation3], 1
    %1678 = vsyncpa %s1677, 1
    %1679 = vsyncpa [#allocation6], 1
    %1680 = vsyncpa [#allocation4], 1
    %s1681 = scalar_lea.sflag [#allocation4], 1
    %1682 = vsyncpa %s1681, 1

</llo_original>
